<compile_context>
chip_gen: v5e
topology: v5e:2x2
jax: 0.10.0
libtpu: 0.0.40
codegen_flags: <defaults>
</compile_context>

<pallas_src>
import functools
import math

import jax
import jax.numpy as jnp
from jax.experimental import pallas as pl
from jax.experimental.pallas import tpu as pltpu


# ----------------------------------------------------------------------------- helpers
def _layer_norm(x, w, b, eps=1e-5):
    mean = jnp.mean(x, axis=-1, keepdims=True)
    xc = x - mean
    var = jnp.mean(xc * xc, axis=-1, keepdims=True)
    return xc * jax.lax.rsqrt(var + eps) * w + b


def _quick_gelu(x):
    return x * jax.nn.sigmoid(1.702 * x)


# ----------------------------------------------------------------------------- kernel
def _make_kernel(n_head, b_tile, seq_len, has_mask):
    def kernel(*refs):
        if has_mask:
            (x_ref, mask_ref, ln1w_ref, ln1b_ref, wqkv_ref, bqkv_ref,
             wo_ref, bo_ref, ln2w_ref, ln2b_ref,
             w1_ref, b1_ref, w2_ref, b2_ref, o_ref) = refs
        else:
            (x_ref, ln1w_ref, ln1b_ref, wqkv_ref, bqkv_ref,
             wo_ref, bo_ref, ln2w_ref, ln2b_ref,
             w1_ref, b1_ref, w2_ref, b2_ref, o_ref) = refs
            mask_ref = None

        d_model = x_ref.shape[-1]
        head_dim = d_model // n_head
        rows = b_tile * seq_len
        cdt = wqkv_ref.dtype            # matmul input dtype (f32, or bf16 on v6e/v7x)

        # (B_TILE, L, D) block -> (B_TILE*L, D) slab (leading-dim merge, free).
        x = x_ref[...].reshape(rows, d_model)

        # ---------------- attention branch ----------------
        h = _layer_norm(x, ln1w_ref[0], ln1b_ref[0])
        # single fused QKV matmul: (rows, D) @ (D, 3D); q already pre-scaled in weights
        qkv = jnp.dot(h.astype(cdt), wqkv_ref[...],
                      preferred_element_type=jnp.float32) + bqkv_ref[0]
        q = qkv[:, :d_model].reshape(b_tile, seq_len, d_model)
        k = qkv[:, d_model:2 * d_model].reshape(b_tile, seq_len, d_model)
        v = qkv[:, 2 * d_model:].reshape(b_tile, seq_len, d_model)

        # running f32 accumulator for attn @ Wo (no head_outs list / lane concat)
        attn = jnp.zeros((rows, d_model), jnp.float32)
        for hh in range(n_head):                       # static, unrolled
            lo = hh * head_dim
            ctx_rows = []
            for b in range(b_tile):                    # static, unrolled
                qh = q[b][:, lo:lo + head_dim].astype(cdt)   # (L, hd)
                kh = k[b][:, lo:lo + head_dim].astype(cdt)
                vh = v[b][:, lo:lo + head_dim].astype(cdt)
                s = jnp.dot(qh, kh.T, preferred_element_type=jnp.float32)  # (L, L)
                if has_mask:
                    s = s + mask_ref[...]
                s = s - jnp.max(s, axis=-1, keepdims=True)
                p = jnp.exp(s)
                p = p * pl.reciprocal(jnp.sum(p, axis=-1, keepdims=True), approx=True)
                ctx_rows.append(jnp.dot(p.astype(cdt), vh,
                                        preferred_element_type=jnp.float32))
            # stack along rows (sublane axis) so the Wo matmul keeps M = B_TILE*L
            ctx = jnp.concatenate(ctx_rows, axis=0)    # (rows, hd)
            attn = attn + jnp.dot(ctx.astype(cdt), wo_ref[lo:lo + head_dim, :],
                                  preferred_element_type=jnp.float32)
        attn = attn + bo_ref[0]
        x1 = x + attn

        # ---------------- MLP branch ----------------
        h2 = _layer_norm(x1, ln2w_ref[0], ln2b_ref[0])
        m = jnp.dot(h2.astype(cdt), w1_ref[...],
                    preferred_element_type=jnp.float32) + b1_ref[0]
        m = _quick_gelu(m)
        m = jnp.dot(m.astype(cdt), w2_ref[...],
                    preferred_element_type=jnp.float32) + b2_ref[0]

        o_ref[...] = (x1 + m).reshape(b_tile, seq_len, d_model)

    return kernel


# ----------------------------------------------------------------------------- wrappers
def _pick_b_tile(n):
    for cand in (8, 4, 2, 1):
        if n % cand == 0:
            return min(cand, n)
    return 1


def residual_attention_block_nld(x, params, n_head, *, attn_mask=None, b_tile=None):
    """Fast path. x: (N, L, D) batch-major float32 — no HBM transposes anywhere."""
    N, L, D = x.shape
    Dff = params["w1_t"].shape[-1]
    if b_tile is None:
        b_tile = _pick_b_tile(N)
    assert N % b_tile == 0, "batch must be divisible by b_tile"
    grid = (N // b_tile,)
    has_mask = attn_mask is not None

    const2d = lambda shape: pl.BlockSpec(shape, lambda i: (0, 0))  # resident weights

    in_specs = [pl.BlockSpec((b_tile, L, D), lambda i: (i, 0, 0))]
    args = [x]
    if has_mask:
        in_specs.append(const2d((L, L)))
        args.append(attn_mask.astype(jnp.float32))
    in_specs += [
        const2d((1, D)), const2d((1, D)),            # ln1 w, b
        const2d((D, 3 * D)), const2d((1, 3 * D)),    # fused Wqkv^T, bqkv (q pre-scaled)
        const2d((D, D)), const2d((1, D)),            # Wo^T, bo
        const2d((1, D)), const2d((1, D)),            # ln2 w, b
        const2d((D, Dff)), const2d((1, Dff)),        # W1^T, b1
        const2d((Dff, D)), const2d((1, D)),          # W2^T, b2
    ]
    args += [params["ln1_w"], params["ln1_b"], params["wqkv_t"], params["bqkv"],
             params["wo_t"], params["bo"], params["ln2_w"], params["ln2_b"],
             params["w1_t"], params["b1"], params["w2_t"], params["b2"]]

    kernel = _make_kernel(n_head, b_tile, L, has_mask)
    return pl.pallas_call(
        kernel,
        grid=grid,
        in_specs=in_specs,
        out_specs=pl.BlockSpec((b_tile, L, D), lambda i: (i, 0, 0)),
        out_shape=jax.ShapeDtypeStruct((N, L, D), jnp.float32),
        compiler_params=pltpu.CompilerParams(
            dimension_semantics=("parallel",),          # batch axis -> both v7x TCs
            vmem_limit_bytes=64 * 1024 * 1024),
    )(*args)


def residual_attention_block(x, params, n_head, *, attn_mask=None, b_tile=None):
    """PyTorch-layout shim: x (L, N, D) as nn.MultiheadAttention expects.
    Prefer residual_attention_block_nld in production (avoids the two HBM transposes)."""
    y = residual_attention_block_nld(jnp.transpose(x, (1, 0, 2)), params, n_head,
                                     attn_mask=attn_mask, b_tile=b_tile)
    return jnp.transpose(y, (1, 0, 2))


# ----------------------------------------------------------------------------- params
def init_params(key, d_model):
    """Raw parameters with the same shapes as the PyTorch module."""
    ks = jax.random.split(key, 8)
    s = 0.02
    d_ff = 4 * d_model
    return {
        "ln1_w": jnp.ones((d_model,), jnp.float32),
        "ln1_b": jnp.zeros((d_model,), jnp.float32),
        "in_proj_w": s * jax.random.normal(ks[0], (3 * d_model, d_model), jnp.float32),
        "in_proj_b": s * jax.random.normal(ks[1], (3 * d_model,), jnp.float32),
        "out_proj_w": s * jax.random.normal(ks[2], (d_model, d_model), jnp.float32),
        "out_proj_b": s * jax.random.normal(ks[3], (d_model,), jnp.float32),
        "ln2_w": jnp.ones((d_model,), jnp.float32),
        "ln2_b": jnp.zeros((d_model,), jnp.float32),
        "w1": s * jax.random.normal(ks[4], (d_ff, d_model), jnp.float32),
        "b1": s * jax.random.normal(ks[5], (d_ff,), jnp.float32),
        "w2": s * jax.random.normal(ks[6], (d_model, d_ff), jnp.float32),
        "b2": s * jax.random.normal(ks[7], (d_model,), jnp.float32),
    }


def pack_params(raw, n_head, compute_dtype=jnp.float32):
    """One-time parameter transform for the kernel.
    compute_dtype=jnp.bfloat16 is recommended on v6e/v7x (f32 accumulation is kept)."""
    d_model = raw["out_proj_w"].shape[0]
    head_dim = d_model // n_head
    scale = 1.0 / math.sqrt(head_dim)

    wq, wk, wv = jnp.split(raw["in_proj_w"], 3, axis=0)
    bq, bk, bv = jnp.split(raw["in_proj_b"], 3, axis=0)
    # fold the 1/sqrt(head_dim) attention scale into the Q projection
    wqkv_t = jnp.concatenate([wq.T * scale, wk.T, wv.T], axis=1)   # (D, 3D)
    bqkv = jnp.concatenate([bq * scale, bk, bv], axis=0)           # (3D,)

    row = lambda v: v.reshape(1, -1).astype(jnp.float32)   # biases / LN stay f32
    w = lambda m: m.astype(compute_dtype)
    return {
        "ln1_w": row(raw["ln1_w"]), "ln1_b": row(raw["ln1_b"]),
        "wqkv_t": w(wqkv_t), "bqkv": row(bqkv),
        "wo_t": w(raw["out_proj_w"].T), "bo": row(raw["out_proj_b"]),
        "ln2_w": row(raw["ln2_w"]), "ln2_b": row(raw["ln2_b"]),
        "w1_t": w(raw["w1"].T), "b1": row(raw["b1"]),
        "w2_t": w(raw["w2"].T), "b2": row(raw["b2"]),
    }


# ----------------------------------------------------------------------------- pure-JAX reference
def reference_nld(x, raw, n_head, attn_mask=None):
    N, L, D = x.shape
    hd = D // n_head

    def ln(t, w, b, eps=1e-5):
        mu = jnp.mean(t, -1, keepdims=True)
        var = jnp.mean((t - mu) ** 2, -1, keepdims=True)
        return (t - mu) / jnp.sqrt(var + eps) * w + b

    h = ln(x, raw["ln1_w"], raw["ln1_b"])
    qkv = h @ raw["in_proj_w"].T + raw["in_proj_b"]
    q, k, v = jnp.split(qkv, 3, axis=-1)
    split_heads = lambda t: t.reshape(N, L, n_head, hd).transpose(0, 2, 1, 3)
    q, k, v = split_heads(q), split_heads(k), split_heads(v)
    s = jnp.einsum("nhld,nhmd->nhlm", q, k) / math.sqrt(hd)
    if attn_mask is not None:
        s = s + attn_mask
    p = jax.nn.softmax(s, axis=-1)
    ctx = jnp.einsum("nhlm,nhmd->nhld", p, v).transpose(0, 2, 1, 3).reshape(N, L, D)
    attn = ctx @ raw["out_proj_w"].T + raw["out_proj_b"]
    x1 = x + attn
    h2 = ln(x1, raw["ln2_w"], raw["ln2_b"])
    m = h2 @ raw["w1"].T + raw["b1"]
    m = m * jax.nn.sigmoid(1.702 * m)
    m = m @ raw["w2"].T + raw["b2"]
    return x1 + m


# ----------------------------------------------------------------------------- demo
if __name__ == "__main__":
    L, N, d_model, n_head = 8, 4, 32, 4     # seq=8, batch=4, hidden=32, 4 heads
    key = jax.random.PRNGKey(0)
    kx, kp = jax.random.split(key)
    x_lnd = jax.random.normal(kx, (L, N, d_model), jnp.float32)
    raw = init_params(kp, d_model)
    params = pack_params(raw, n_head)       # f32; use compute_dtype=jnp.bfloat16 on v6e/v7x

    # 1) PyTorch-layout path, attn_mask=None (module default)
    out = residual_attention_block(x_lnd, params, n_head, b_tile=2)
    jax.block_until_ready(out)
    assert out.shape == (L, N, d_model) and out.dtype == jnp.float32

    x_nld = jnp.transpose(x_lnd, (1, 0, 2))
    ref = reference_nld(x_nld, raw, n_head)
    err = float(jnp.max(jnp.abs(jnp.transpose(out, (1, 0, 2)) - ref)))
    assert jnp.allclose(jnp.transpose(out, (1, 0, 2)), ref, atol=2e-3, rtol=2e-3), err

    # 2) batch-major fast path with a causal additive mask (CLIP text-transformer case)
    causal = jnp.where(jnp.arange(L)[:, None] >= jnp.arange(L)[None, :],
                       0.0, -1e9).astype(jnp.float32)
    out_m = residual_attention_block_nld(x_nld, params, n_head, attn_mask=causal, b_tile=2)
    jax.block_until_ready(out_m)
    ref_m = reference_nld(x_nld, raw, n_head, attn_mask=causal)
    err_m = float(jnp.max(jnp.abs(out_m - ref_m)))
    assert jnp.allclose(out_m, ref_m, atol=2e-3, rtol=2e-3), err_m

    print("KERNEL_OK")
</pallas_src>

<mosaic_0001>
module attributes {stable_mosaic.version = 11 : i64} {
  func.func @kernel(%arg0: i32, %arg1: memref<2x8x32xf32, #tpu.memory_space<vmem>>, %arg2: memref<1x32xf32, #tpu.memory_space<vmem>>, %arg3: memref<1x32xf32, #tpu.memory_space<vmem>>, %arg4: memref<32x96xf32, #tpu.memory_space<vmem>>, %arg5: memref<1x96xf32, #tpu.memory_space<vmem>>, %arg6: memref<32x32xf32, #tpu.memory_space<vmem>>, %arg7: memref<1x32xf32, #tpu.memory_space<vmem>>, %arg8: memref<1x32xf32, #tpu.memory_space<vmem>>, %arg9: memref<1x32xf32, #tpu.memory_space<vmem>>, %arg10: memref<32x128xf32, #tpu.memory_space<vmem>>, %arg11: memref<1x128xf32, #tpu.memory_space<vmem>>, %arg12: memref<128x32xf32, #tpu.memory_space<vmem>>, %arg13: memref<1x32xf32, #tpu.memory_space<vmem>>, %arg14: memref<2x8x32xf32, #tpu.memory_space<vmem>>) attributes {dimension_semantics = [#tpu.dimension_semantics<parallel>], iteration_bounds = array<i64: 2>, scalar_prefetch = 0 : i64, scratch_operands = 0 : i64, tpu.core_type = #tpu.core_type<tc>, window_params = [{transform_indices = @transform_0, window_bounds = array<i64: 2, 8, 32>}, {pipeline_mode = #tpu.pipeline_mode<synchronous>, transform_indices = @transform_1, window_bounds = array<i64: 1, 32>}, {pipeline_mode = #tpu.pipeline_mode<synchronous>, transform_indices = @transform_2, window_bounds = array<i64: 1, 32>}, {pipeline_mode = #tpu.pipeline_mode<synchronous>, transform_indices = @transform_3, window_bounds = array<i64: 32, 96>}, {pipeline_mode = #tpu.pipeline_mode<synchronous>, transform_indices = @transform_4, window_bounds = array<i64: 1, 96>}, {pipeline_mode = #tpu.pipeline_mode<synchronous>, transform_indices = @transform_5, window_bounds = array<i64: 32, 32>}, {pipeline_mode = #tpu.pipeline_mode<synchronous>, transform_indices = @transform_6, window_bounds = array<i64: 1, 32>}, {pipeline_mode = #tpu.pipeline_mode<synchronous>, transform_indices = @transform_7, window_bounds = array<i64: 1, 32>}, {pipeline_mode = #tpu.pipeline_mode<synchronous>, transform_indices = @transform_8, window_bounds = array<i64: 1, 32>}, {pipeline_mode = #tpu.pipeline_mode<synchronous>, transform_indices = @transform_9, window_bounds = array<i64: 32, 128>}, {pipeline_mode = #tpu.pipeline_mode<synchronous>, transform_indices = @transform_10, window_bounds = array<i64: 1, 128>}, {pipeline_mode = #tpu.pipeline_mode<synchronous>, transform_indices = @transform_11, window_bounds = array<i64: 128, 32>}, {pipeline_mode = #tpu.pipeline_mode<synchronous>, transform_indices = @transform_12, window_bounds = array<i64: 1, 32>}, {transform_indices = @transform_13, window_bounds = array<i64: 2, 8, 32>}]} {
    %c0 = arith.constant 0 : index
    %c0_0 = arith.constant 0 : index
    %c0_1 = arith.constant 0 : index
    %0 = vector.load %arg1[%c0, %c0_0, %c0_1] : memref<2x8x32xf32, #tpu.memory_space<vmem>>, vector<2x8x32xf32>
    %1 = vector.shape_cast %0 : vector<2x8x32xf32> to vector<16x32xf32>
    %c0_2 = arith.constant 0 : index
    %c0_3 = arith.constant 0 : index
    %2 = vector.load %arg2[%c0_2, %c0_3] : memref<1x32xf32, #tpu.memory_space<vmem>>, vector<1x32xf32>
    %3 = vector.shape_cast %2 : vector<1x32xf32> to vector<32xf32>
    %c0_4 = arith.constant 0 : index
    %c0_5 = arith.constant 0 : index
    %4 = vector.load %arg3[%c0_4, %c0_5] : memref<1x32xf32, #tpu.memory_space<vmem>>, vector<1x32xf32>
    %5 = vector.shape_cast %4 : vector<1x32xf32> to vector<32xf32>
    %cst = arith.constant dense<0.000000e+00> : vector<16xf32>
    %6 = vector.multi_reduction <add>, %1, %cst [1] : vector<16x32xf32> to vector<16xf32>
    %7 = vector.shape_cast %6 : vector<16xf32> to vector<16x1xf32>
    %cst_6 = arith.constant 3.200000e+01 : f32
    %8 = vector.broadcast %cst_6 : f32 to vector<16x1xf32>
    %9 = arith.divf %7, %8 : vector<16x1xf32>
    %10 = vector.broadcast %9 : vector<16x1xf32> to vector<16x32xf32>
    %11 = arith.subf %1, %10 : vector<16x32xf32>
    %12 = arith.mulf %11, %11 : vector<16x32xf32>
    %cst_7 = arith.constant dense<0.000000e+00> : vector<16xf32>
    %13 = vector.multi_reduction <add>, %12, %cst_7 [1] : vector<16x32xf32> to vector<16xf32>
    %14 = vector.shape_cast %13 : vector<16xf32> to vector<16x1xf32>
    %cst_8 = arith.constant 3.200000e+01 : f32
    %15 = vector.broadcast %cst_8 : f32 to vector<16x1xf32>
    %16 = arith.divf %14, %15 : vector<16x1xf32>
    %cst_9 = arith.constant 9.99999974E-6 : f32
    %17 = vector.broadcast %cst_9 : f32 to vector<16x1xf32>
    %18 = arith.addf %16, %17 : vector<16x1xf32>
    %19 = math.rsqrt %18 : vector<16x1xf32>
    %20 = vector.broadcast %19 : vector<16x1xf32> to vector<16x32xf32>
    %21 = arith.mulf %11, %20 : vector<16x32xf32>
    %22 = vector.shape_cast %3 : vector<32xf32> to vector<1x32xf32>
    %23 = vector.broadcast %22 : vector<1x32xf32> to vector<16x32xf32>
    %24 = arith.mulf %21, %23 : vector<16x32xf32>
    %25 = vector.shape_cast %5 : vector<32xf32> to vector<1x32xf32>
    %26 = vector.broadcast %25 : vector<1x32xf32> to vector<16x32xf32>
    %27 = arith.addf %24, %26 : vector<16x32xf32>
    %c0_10 = arith.constant 0 : index
    %c0_11 = arith.constant 0 : index
    %28 = vector.load %arg4[%c0_10, %c0_11] : memref<32x96xf32, #tpu.memory_space<vmem>>, vector<32x96xf32>
    %cst_12 = arith.constant dense<0.000000e+00> : vector<16x96xf32>
    %29 = tpu.matmul %27, %28, %cst_12 {dimension_numbers = #tpu.dot_dimension_numbers<[1], [0], [0], [1], [0, 0, 1, 1], [], []>} : vector<16x32xf32>, vector<32x96xf32>, vector<16x96xf32> -> vector<16x96xf32>
    %c0_13 = arith.constant 0 : index
    %c0_14 = arith.constant 0 : index
    %30 = vector.load %arg5[%c0_13, %c0_14] : memref<1x96xf32, #tpu.memory_space<vmem>>, vector<1x96xf32>
    %31 = vector.shape_cast %30 : vector<1x96xf32> to vector<96xf32>
    %32 = vector.shape_cast %31 : vector<96xf32> to vector<1x96xf32>
    %33 = vector.broadcast %32 : vector<1x96xf32> to vector<16x96xf32>
    %34 = arith.addf %29, %33 : vector<16x96xf32>
    %35 = vector.extract_strided_slice %34 {offsets = [0, 0], sizes = [16, 32], strides = [1, 1]} : vector<16x96xf32> to vector<16x32xf32>
    %36 = vector.shape_cast %35 : vector<16x32xf32> to vector<2x8x32xf32>
    %37 = vector.extract_strided_slice %34 {offsets = [0, 32], sizes = [16, 32], strides = [1, 1]} : vector<16x96xf32> to vector<16x32xf32>
    %38 = vector.shape_cast %37 : vector<16x32xf32> to vector<2x8x32xf32>
    %39 = vector.extract_strided_slice %34 {offsets = [0, 64], sizes = [16, 32], strides = [1, 1]} : vector<16x96xf32> to vector<16x32xf32>
    %40 = vector.shape_cast %39 : vector<16x32xf32> to vector<2x8x32xf32>
    %cst_15 = arith.constant 0.000000e+00 : f32
    %41 = vector.broadcast %cst_15 : f32 to vector<16x32xf32>
    %42 = vector.extract_strided_slice %36 {offsets = [0, 0, 0], sizes = [1, 8, 32], strides = [1, 1, 1]} : vector<2x8x32xf32> to vector<1x8x32xf32>
    %43 = vector.shape_cast %42 : vector<1x8x32xf32> to vector<8x32xf32>
    %44 = vector.extract_strided_slice %43 {offsets = [0, 0], sizes = [8, 8], strides = [1, 1]} : vector<8x32xf32> to vector<8x8xf32>
    %45 = vector.extract_strided_slice %38 {offsets = [0, 0, 0], sizes = [1, 8, 32], strides = [1, 1, 1]} : vector<2x8x32xf32> to vector<1x8x32xf32>
    %46 = vector.shape_cast %45 : vector<1x8x32xf32> to vector<8x32xf32>
    %47 = vector.extract_strided_slice %46 {offsets = [0, 0], sizes = [8, 8], strides = [1, 1]} : vector<8x32xf32> to vector<8x8xf32>
    %48 = vector.extract_strided_slice %40 {offsets = [0, 0, 0], sizes = [1, 8, 32], strides = [1, 1, 1]} : vector<2x8x32xf32> to vector<1x8x32xf32>
    %49 = vector.shape_cast %48 : vector<1x8x32xf32> to vector<8x32xf32>
    %50 = vector.extract_strided_slice %49 {offsets = [0, 0], sizes = [8, 8], strides = [1, 1]} : vector<8x32xf32> to vector<8x8xf32>
    %51 = tpu.transpose %47, [1, 0] : vector<8x8xf32> -> vector<8x8xf32>
    %cst_16 = arith.constant dense<0.000000e+00> : vector<8x8xf32>
    %52 = tpu.matmul %44, %51, %cst_16 {dimension_numbers = #tpu.dot_dimension_numbers<[1], [0], [0], [1], [0, 0, 1, 1], [], []>} : vector<8x8xf32>, vector<8x8xf32>, vector<8x8xf32> -> vector<8x8xf32>
    %cst_17 = arith.constant dense<0xFF800000> : vector<8xf32>
    %53 = vector.multi_reduction <maximumf>, %52, %cst_17 [1] : vector<8x8xf32> to vector<8xf32>
    %54 = vector.shape_cast %53 : vector<8xf32> to vector<8x1xf32>
    %55 = vector.broadcast %54 : vector<8x1xf32> to vector<8x8xf32>
    %56 = arith.subf %52, %55 : vector<8x8xf32>
    %57 = math.exp %56 : vector<8x8xf32>
    %cst_18 = arith.constant dense<0.000000e+00> : vector<8xf32>
    %58 = vector.multi_reduction <add>, %57, %cst_18 [1] : vector<8x8xf32> to vector<8xf32>
    %59 = vector.shape_cast %58 : vector<8xf32> to vector<8x1xf32>
    %60 = tpu.reciprocal %59 {approx = true} : vector<8x1xf32> -> vector<8x1xf32>
    %61 = vector.broadcast %60 : vector<8x1xf32> to vector<8x8xf32>
    %62 = arith.mulf %57, %61 : vector<8x8xf32>
    %cst_19 = arith.constant dense<0.000000e+00> : vector<8x8xf32>
    %63 = tpu.matmul %62, %50, %cst_19 {dimension_numbers = #tpu.dot_dimension_numbers<[1], [0], [0], [1], [0, 0, 1, 1], [], []>} : vector<8x8xf32>, vector<8x8xf32>, vector<8x8xf32> -> vector<8x8xf32>
    %64 = vector.extract_strided_slice %36 {offsets = [1, 0, 0], sizes = [1, 8, 32], strides = [1, 1, 1]} : vector<2x8x32xf32> to vector<1x8x32xf32>
    %65 = vector.shape_cast %64 : vector<1x8x32xf32> to vector<8x32xf32>
    %66 = vector.extract_strided_slice %65 {offsets = [0, 0], sizes = [8, 8], strides = [1, 1]} : vector<8x32xf32> to vector<8x8xf32>
    %67 = vector.extract_strided_slice %38 {offsets = [1, 0, 0], sizes = [1, 8, 32], strides = [1, 1, 1]} : vector<2x8x32xf32> to vector<1x8x32xf32>
    %68 = vector.shape_cast %67 : vector<1x8x32xf32> to vector<8x32xf32>
    %69 = vector.extract_strided_slice %68 {offsets = [0, 0], sizes = [8, 8], strides = [1, 1]} : vector<8x32xf32> to vector<8x8xf32>
    %70 = vector.extract_strided_slice %40 {offsets = [1, 0, 0], sizes = [1, 8, 32], strides = [1, 1, 1]} : vector<2x8x32xf32> to vector<1x8x32xf32>
    %71 = vector.shape_cast %70 : vector<1x8x32xf32> to vector<8x32xf32>
    %72 = vector.extract_strided_slice %71 {offsets = [0, 0], sizes = [8, 8], strides = [1, 1]} : vector<8x32xf32> to vector<8x8xf32>
    %73 = tpu.transpose %69, [1, 0] : vector<8x8xf32> -> vector<8x8xf32>
    %cst_20 = arith.constant dense<0.000000e+00> : vector<8x8xf32>
    %74 = tpu.matmul %66, %73, %cst_20 {dimension_numbers = #tpu.dot_dimension_numbers<[1], [0], [0], [1], [0, 0, 1, 1], [], []>} : vector<8x8xf32>, vector<8x8xf32>, vector<8x8xf32> -> vector<8x8xf32>
    %cst_21 = arith.constant dense<0xFF800000> : vector<8xf32>
    %75 = vector.multi_reduction <maximumf>, %74, %cst_21 [1] : vector<8x8xf32> to vector<8xf32>
    %76 = vector.shape_cast %75 : vector<8xf32> to vector<8x1xf32>
    %77 = vector.broadcast %76 : vector<8x1xf32> to vector<8x8xf32>
    %78 = arith.subf %74, %77 : vector<8x8xf32>
    %79 = math.exp %78 : vector<8x8xf32>
    %cst_22 = arith.constant dense<0.000000e+00> : vector<8xf32>
    %80 = vector.multi_reduction <add>, %79, %cst_22 [1] : vector<8x8xf32> to vector<8xf32>
    %81 = vector.shape_cast %80 : vector<8xf32> to vector<8x1xf32>
    %82 = tpu.reciprocal %81 {approx = true} : vector<8x1xf32> -> vector<8x1xf32>
    %83 = vector.broadcast %82 : vector<8x1xf32> to vector<8x8xf32>
    %84 = arith.mulf %79, %83 : vector<8x8xf32>
    %cst_23 = arith.constant dense<0.000000e+00> : vector<8x8xf32>
    %85 = tpu.matmul %84, %72, %cst_23 {dimension_numbers = #tpu.dot_dimension_numbers<[1], [0], [0], [1], [0, 0, 1, 1], [], []>} : vector<8x8xf32>, vector<8x8xf32>, vector<8x8xf32> -> vector<8x8xf32>
    %86 = tpu.concatenate %63, %85 in 0 : vector<8x8xf32>, vector<8x8xf32> -> vector<16x8xf32>
    %c0_24 = arith.constant 0 : index
    %c0_25 = arith.constant 0 : index
    %87 = vector.load %arg6[%c0_24, %c0_25] : memref<32x32xf32, #tpu.memory_space<vmem>>, vector<8x32xf32>
    %cst_26 = arith.constant dense<0.000000e+00> : vector<16x32xf32>
    %88 = tpu.matmul %86, %87, %cst_26 {dimension_numbers = #tpu.dot_dimension_numbers<[1], [0], [0], [1], [0, 0, 1, 1], [], []>} : vector<16x8xf32>, vector<8x32xf32>, vector<16x32xf32> -> vector<16x32xf32>
    %89 = arith.addf %41, %88 : vector<16x32xf32>
    %90 = vector.extract_strided_slice %36 {offsets = [0, 0, 0], sizes = [1, 8, 32], strides = [1, 1, 1]} : vector<2x8x32xf32> to vector<1x8x32xf32>
    %91 = vector.shape_cast %90 : vector<1x8x32xf32> to vector<8x32xf32>
    %92 = vector.extract_strided_slice %91 {offsets = [0, 8], sizes = [8, 8], strides = [1, 1]} : vector<8x32xf32> to vector<8x8xf32>
    %93 = vector.extract_strided_slice %38 {offsets = [0, 0, 0], sizes = [1, 8, 32], strides = [1, 1, 1]} : vector<2x8x32xf32> to vector<1x8x32xf32>
    %94 = vector.shape_cast %93 : vector<1x8x32xf32> to vector<8x32xf32>
    %95 = vector.extract_strided_slice %94 {offsets = [0, 8], sizes = [8, 8], strides = [1, 1]} : vector<8x32xf32> to vector<8x8xf32>
    %96 = vector.extract_strided_slice %40 {offsets = [0, 0, 0], sizes = [1, 8, 32], strides = [1, 1, 1]} : vector<2x8x32xf32> to vector<1x8x32xf32>
    %97 = vector.shape_cast %96 : vector<1x8x32xf32> to vector<8x32xf32>
    %98 = vector.extract_strided_slice %97 {offsets = [0, 8], sizes = [8, 8], strides = [1, 1]} : vector<8x32xf32> to vector<8x8xf32>
    %99 = tpu.transpose %95, [1, 0] : vector<8x8xf32> -> vector<8x8xf32>
    %cst_27 = arith.constant dense<0.000000e+00> : vector<8x8xf32>
    %100 = tpu.matmul %92, %99, %cst_27 {dimension_numbers = #tpu.dot_dimension_numbers<[1], [0], [0], [1], [0, 0, 1, 1], [], []>} : vector<8x8xf32>, vector<8x8xf32>, vector<8x8xf32> -> vector<8x8xf32>
    %cst_28 = arith.constant dense<0xFF800000> : vector<8xf32>
    %101 = vector.multi_reduction <maximumf>, %100, %cst_28 [1] : vector<8x8xf32> to vector<8xf32>
    %102 = vector.shape_cast %101 : vector<8xf32> to vector<8x1xf32>
    %103 = vector.broadcast %102 : vector<8x1xf32> to vector<8x8xf32>
    %104 = arith.subf %100, %103 : vector<8x8xf32>
    %105 = math.exp %104 : vector<8x8xf32>
    %cst_29 = arith.constant dense<0.000000e+00> : vector<8xf32>
    %106 = vector.multi_reduction <add>, %105, %cst_29 [1] : vector<8x8xf32> to vector<8xf32>
    %107 = vector.shape_cast %106 : vector<8xf32> to vector<8x1xf32>
    %108 = tpu.reciprocal %107 {approx = true} : vector<8x1xf32> -> vector<8x1xf32>
    %109 = vector.broadcast %108 : vector<8x1xf32> to vector<8x8xf32>
    %110 = arith.mulf %105, %109 : vector<8x8xf32>
    %cst_30 = arith.constant dense<0.000000e+00> : vector<8x8xf32>
    %111 = tpu.matmul %110, %98, %cst_30 {dimension_numbers = #tpu.dot_dimension_numbers<[1], [0], [0], [1], [0, 0, 1, 1], [], []>} : vector<8x8xf32>, vector<8x8xf32>, vector<8x8xf32> -> vector<8x8xf32>
    %112 = vector.extract_strided_slice %36 {offsets = [1, 0, 0], sizes = [1, 8, 32], strides = [1, 1, 1]} : vector<2x8x32xf32> to vector<1x8x32xf32>
    %113 = vector.shape_cast %112 : vector<1x8x32xf32> to vector<8x32xf32>
    %114 = vector.extract_strided_slice %113 {offsets = [0, 8], sizes = [8, 8], strides = [1, 1]} : vector<8x32xf32> to vector<8x8xf32>
    %115 = vector.extract_strided_slice %38 {offsets = [1, 0, 0], sizes = [1, 8, 32], strides = [1, 1, 1]} : vector<2x8x32xf32> to vector<1x8x32xf32>
    %116 = vector.shape_cast %115 : vector<1x8x32xf32> to vector<8x32xf32>
    %117 = vector.extract_strided_slice %116 {offsets = [0, 8], sizes = [8, 8], strides = [1, 1]} : vector<8x32xf32> to vector<8x8xf32>
    %118 = vector.extract_strided_slice %40 {offsets = [1, 0, 0], sizes = [1, 8, 32], strides = [1, 1, 1]} : vector<2x8x32xf32> to vector<1x8x32xf32>
    %119 = vector.shape_cast %118 : vector<1x8x32xf32> to vector<8x32xf32>
    %120 = vector.extract_strided_slice %119 {offsets = [0, 8], sizes = [8, 8], strides = [1, 1]} : vector<8x32xf32> to vector<8x8xf32>
    %121 = tpu.transpose %117, [1, 0] : vector<8x8xf32> -> vector<8x8xf32>
    %cst_31 = arith.constant dense<0.000000e+00> : vector<8x8xf32>
    %122 = tpu.matmul %114, %121, %cst_31 {dimension_numbers = #tpu.dot_dimension_numbers<[1], [0], [0], [1], [0, 0, 1, 1], [], []>} : vector<8x8xf32>, vector<8x8xf32>, vector<8x8xf32> -> vector<8x8xf32>
    %cst_32 = arith.constant dense<0xFF800000> : vector<8xf32>
    %123 = vector.multi_reduction <maximumf>, %122, %cst_32 [1] : vector<8x8xf32> to vector<8xf32>
    %124 = vector.shape_cast %123 : vector<8xf32> to vector<8x1xf32>
    %125 = vector.broadcast %124 : vector<8x1xf32> to vector<8x8xf32>
    %126 = arith.subf %122, %125 : vector<8x8xf32>
    %127 = math.exp %126 : vector<8x8xf32>
    %cst_33 = arith.constant dense<0.000000e+00> : vector<8xf32>
    %128 = vector.multi_reduction <add>, %127, %cst_33 [1] : vector<8x8xf32> to vector<8xf32>
    %129 = vector.shape_cast %128 : vector<8xf32> to vector<8x1xf32>
    %130 = tpu.reciprocal %129 {approx = true} : vector<8x1xf32> -> vector<8x1xf32>
    %131 = vector.broadcast %130 : vector<8x1xf32> to vector<8x8xf32>
    %132 = arith.mulf %127, %131 : vector<8x8xf32>
    %cst_34 = arith.constant dense<0.000000e+00> : vector<8x8xf32>
    %133 = tpu.matmul %132, %120, %cst_34 {dimension_numbers = #tpu.dot_dimension_numbers<[1], [0], [0], [1], [0, 0, 1, 1], [], []>} : vector<8x8xf32>, vector<8x8xf32>, vector<8x8xf32> -> vector<8x8xf32>
    %134 = tpu.concatenate %111, %133 in 0 : vector<8x8xf32>, vector<8x8xf32> -> vector<16x8xf32>
    %c8 = arith.constant 8 : index
    %c0_35 = arith.constant 0 : index
    %135 = vector.load %arg6[%c8, %c0_35] : memref<32x32xf32, #tpu.memory_space<vmem>>, vector<8x32xf32>
    %cst_36 = arith.constant dense<0.000000e+00> : vector<16x32xf32>
    %136 = tpu.matmul %134, %135, %cst_36 {dimension_numbers = #tpu.dot_dimension_numbers<[1], [0], [0], [1], [0, 0, 1, 1], [], []>} : vector<16x8xf32>, vector<8x32xf32>, vector<16x32xf32> -> vector<16x32xf32>
    %137 = arith.addf %89, %136 : vector<16x32xf32>
    %138 = vector.extract_strided_slice %36 {offsets = [0, 0, 0], sizes = [1, 8, 32], strides = [1, 1, 1]} : vector<2x8x32xf32> to vector<1x8x32xf32>
    %139 = vector.shape_cast %138 : vector<1x8x32xf32> to vector<8x32xf32>
    %140 = vector.extract_strided_slice %139 {offsets = [0, 16], sizes = [8, 8], strides = [1, 1]} : vector<8x32xf32> to vector<8x8xf32>
    %141 = vector.extract_strided_slice %38 {offsets = [0, 0, 0], sizes = [1, 8, 32], strides = [1, 1, 1]} : vector<2x8x32xf32> to vector<1x8x32xf32>
    %142 = vector.shape_cast %141 : vector<1x8x32xf32> to vector<8x32xf32>
    %143 = vector.extract_strided_slice %142 {offsets = [0, 16], sizes = [8, 8], strides = [1, 1]} : vector<8x32xf32> to vector<8x8xf32>
    %144 = vector.extract_strided_slice %40 {offsets = [0, 0, 0], sizes = [1, 8, 32], strides = [1, 1, 1]} : vector<2x8x32xf32> to vector<1x8x32xf32>
    %145 = vector.shape_cast %144 : vector<1x8x32xf32> to vector<8x32xf32>
    %146 = vector.extract_strided_slice %145 {offsets = [0, 16], sizes = [8, 8], strides = [1, 1]} : vector<8x32xf32> to vector<8x8xf32>
    %147 = tpu.transpose %143, [1, 0] : vector<8x8xf32> -> vector<8x8xf32>
    %cst_37 = arith.constant dense<0.000000e+00> : vector<8x8xf32>
    %148 = tpu.matmul %140, %147, %cst_37 {dimension_numbers = #tpu.dot_dimension_numbers<[1], [0], [0], [1], [0, 0, 1, 1], [], []>} : vector<8x8xf32>, vector<8x8xf32>, vector<8x8xf32> -> vector<8x8xf32>
    %cst_38 = arith.constant dense<0xFF800000> : vector<8xf32>
    %149 = vector.multi_reduction <maximumf>, %148, %cst_38 [1] : vector<8x8xf32> to vector<8xf32>
    %150 = vector.shape_cast %149 : vector<8xf32> to vector<8x1xf32>
    %151 = vector.broadcast %150 : vector<8x1xf32> to vector<8x8xf32>
    %152 = arith.subf %148, %151 : vector<8x8xf32>
    %153 = math.exp %152 : vector<8x8xf32>
    %cst_39 = arith.constant dense<0.000000e+00> : vector<8xf32>
    %154 = vector.multi_reduction <add>, %153, %cst_39 [1] : vector<8x8xf32> to vector<8xf32>
    %155 = vector.shape_cast %154 : vector<8xf32> to vector<8x1xf32>
    %156 = tpu.reciprocal %155 {approx = true} : vector<8x1xf32> -> vector<8x1xf32>
    %157 = vector.broadcast %156 : vector<8x1xf32> to vector<8x8xf32>
    %158 = arith.mulf %153, %157 : vector<8x8xf32>
    %cst_40 = arith.constant dense<0.000000e+00> : vector<8x8xf32>
    %159 = tpu.matmul %158, %146, %cst_40 {dimension_numbers = #tpu.dot_dimension_numbers<[1], [0], [0], [1], [0, 0, 1, 1], [], []>} : vector<8x8xf32>, vector<8x8xf32>, vector<8x8xf32> -> vector<8x8xf32>
    %160 = vector.extract_strided_slice %36 {offsets = [1, 0, 0], sizes = [1, 8, 32], strides = [1, 1, 1]} : vector<2x8x32xf32> to vector<1x8x32xf32>
    %161 = vector.shape_cast %160 : vector<1x8x32xf32> to vector<8x32xf32>
    %162 = vector.extract_strided_slice %161 {offsets = [0, 16], sizes = [8, 8], strides = [1, 1]} : vector<8x32xf32> to vector<8x8xf32>
    %163 = vector.extract_strided_slice %38 {offsets = [1, 0, 0], sizes = [1, 8, 32], strides = [1, 1, 1]} : vector<2x8x32xf32> to vector<1x8x32xf32>
    %164 = vector.shape_cast %163 : vector<1x8x32xf32> to vector<8x32xf32>
    %165 = vector.extract_strided_slice %164 {offsets = [0, 16], sizes = [8, 8], strides = [1, 1]} : vector<8x32xf32> to vector<8x8xf32>
    %166 = vector.extract_strided_slice %40 {offsets = [1, 0, 0], sizes = [1, 8, 32], strides = [1, 1, 1]} : vector<2x8x32xf32> to vector<1x8x32xf32>
    %167 = vector.shape_cast %166 : vector<1x8x32xf32> to vector<8x32xf32>
    %168 = vector.extract_strided_slice %167 {offsets = [0, 16], sizes = [8, 8], strides = [1, 1]} : vector<8x32xf32> to vector<8x8xf32>
    %169 = tpu.transpose %165, [1, 0] : vector<8x8xf32> -> vector<8x8xf32>
    %cst_41 = arith.constant dense<0.000000e+00> : vector<8x8xf32>
    %170 = tpu.matmul %162, %169, %cst_41 {dimension_numbers = #tpu.dot_dimension_numbers<[1], [0], [0], [1], [0, 0, 1, 1], [], []>} : vector<8x8xf32>, vector<8x8xf32>, vector<8x8xf32> -> vector<8x8xf32>
    %cst_42 = arith.constant dense<0xFF800000> : vector<8xf32>
    %171 = vector.multi_reduction <maximumf>, %170, %cst_42 [1] : vector<8x8xf32> to vector<8xf32>
    %172 = vector.shape_cast %171 : vector<8xf32> to vector<8x1xf32>
    %173 = vector.broadcast %172 : vector<8x1xf32> to vector<8x8xf32>
    %174 = arith.subf %170, %173 : vector<8x8xf32>
    %175 = math.exp %174 : vector<8x8xf32>
    %cst_43 = arith.constant dense<0.000000e+00> : vector<8xf32>
    %176 = vector.multi_reduction <add>, %175, %cst_43 [1] : vector<8x8xf32> to vector<8xf32>
    %177 = vector.shape_cast %176 : vector<8xf32> to vector<8x1xf32>
    %178 = tpu.reciprocal %177 {approx = true} : vector<8x1xf32> -> vector<8x1xf32>
    %179 = vector.broadcast %178 : vector<8x1xf32> to vector<8x8xf32>
    %180 = arith.mulf %175, %179 : vector<8x8xf32>
    %cst_44 = arith.constant dense<0.000000e+00> : vector<8x8xf32>
    %181 = tpu.matmul %180, %168, %cst_44 {dimension_numbers = #tpu.dot_dimension_numbers<[1], [0], [0], [1], [0, 0, 1, 1], [], []>} : vector<8x8xf32>, vector<8x8xf32>, vector<8x8xf32> -> vector<8x8xf32>
    %182 = tpu.concatenate %159, %181 in 0 : vector<8x8xf32>, vector<8x8xf32> -> vector<16x8xf32>
    %c16 = arith.constant 16 : index
    %c0_45 = arith.constant 0 : index
    %183 = vector.load %arg6[%c16, %c0_45] : memref<32x32xf32, #tpu.memory_space<vmem>>, vector<8x32xf32>
    %cst_46 = arith.constant dense<0.000000e+00> : vector<16x32xf32>
    %184 = tpu.matmul %182, %183, %cst_46 {dimension_numbers = #tpu.dot_dimension_numbers<[1], [0], [0], [1], [0, 0, 1, 1], [], []>} : vector<16x8xf32>, vector<8x32xf32>, vector<16x32xf32> -> vector<16x32xf32>
    %185 = arith.addf %137, %184 : vector<16x32xf32>
    %186 = vector.extract_strided_slice %36 {offsets = [0, 0, 0], sizes = [1, 8, 32], strides = [1, 1, 1]} : vector<2x8x32xf32> to vector<1x8x32xf32>
    %187 = vector.shape_cast %186 : vector<1x8x32xf32> to vector<8x32xf32>
    %188 = vector.extract_strided_slice %187 {offsets = [0, 24], sizes = [8, 8], strides = [1, 1]} : vector<8x32xf32> to vector<8x8xf32>
    %189 = vector.extract_strided_slice %38 {offsets = [0, 0, 0], sizes = [1, 8, 32], strides = [1, 1, 1]} : vector<2x8x32xf32> to vector<1x8x32xf32>
    %190 = vector.shape_cast %189 : vector<1x8x32xf32> to vector<8x32xf32>
    %191 = vector.extract_strided_slice %190 {offsets = [0, 24], sizes = [8, 8], strides = [1, 1]} : vector<8x32xf32> to vector<8x8xf32>
    %192 = vector.extract_strided_slice %40 {offsets = [0, 0, 0], sizes = [1, 8, 32], strides = [1, 1, 1]} : vector<2x8x32xf32> to vector<1x8x32xf32>
    %193 = vector.shape_cast %192 : vector<1x8x32xf32> to vector<8x32xf32>
    %194 = vector.extract_strided_slice %193 {offsets = [0, 24], sizes = [8, 8], strides = [1, 1]} : vector<8x32xf32> to vector<8x8xf32>
    %195 = tpu.transpose %191, [1, 0] : vector<8x8xf32> -> vector<8x8xf32>
    %cst_47 = arith.constant dense<0.000000e+00> : vector<8x8xf32>
    %196 = tpu.matmul %188, %195, %cst_47 {dimension_numbers = #tpu.dot_dimension_numbers<[1], [0], [0], [1], [0, 0, 1, 1], [], []>} : vector<8x8xf32>, vector<8x8xf32>, vector<8x8xf32> -> vector<8x8xf32>
    %cst_48 = arith.constant dense<0xFF800000> : vector<8xf32>
    %197 = vector.multi_reduction <maximumf>, %196, %cst_48 [1] : vector<8x8xf32> to vector<8xf32>
    %198 = vector.shape_cast %197 : vector<8xf32> to vector<8x1xf32>
    %199 = vector.broadcast %198 : vector<8x1xf32> to vector<8x8xf32>
    %200 = arith.subf %196, %199 : vector<8x8xf32>
    %201 = math.exp %200 : vector<8x8xf32>
    %cst_49 = arith.constant dense<0.000000e+00> : vector<8xf32>
    %202 = vector.multi_reduction <add>, %201, %cst_49 [1] : vector<8x8xf32> to vector<8xf32>
    %203 = vector.shape_cast %202 : vector<8xf32> to vector<8x1xf32>
    %204 = tpu.reciprocal %203 {approx = true} : vector<8x1xf32> -> vector<8x1xf32>
    %205 = vector.broadcast %204 : vector<8x1xf32> to vector<8x8xf32>
    %206 = arith.mulf %201, %205 : vector<8x8xf32>
    %cst_50 = arith.constant dense<0.000000e+00> : vector<8x8xf32>
    %207 = tpu.matmul %206, %194, %cst_50 {dimension_numbers = #tpu.dot_dimension_numbers<[1], [0], [0], [1], [0, 0, 1, 1], [], []>} : vector<8x8xf32>, vector<8x8xf32>, vector<8x8xf32> -> vector<8x8xf32>
    %208 = vector.extract_strided_slice %36 {offsets = [1, 0, 0], sizes = [1, 8, 32], strides = [1, 1, 1]} : vector<2x8x32xf32> to vector<1x8x32xf32>
    %209 = vector.shape_cast %208 : vector<1x8x32xf32> to vector<8x32xf32>
    %210 = vector.extract_strided_slice %209 {offsets = [0, 24], sizes = [8, 8], strides = [1, 1]} : vector<8x32xf32> to vector<8x8xf32>
    %211 = vector.extract_strided_slice %38 {offsets = [1, 0, 0], sizes = [1, 8, 32], strides = [1, 1, 1]} : vector<2x8x32xf32> to vector<1x8x32xf32>
    %212 = vector.shape_cast %211 : vector<1x8x32xf32> to vector<8x32xf32>
    %213 = vector.extract_strided_slice %212 {offsets = [0, 24], sizes = [8, 8], strides = [1, 1]} : vector<8x32xf32> to vector<8x8xf32>
    %214 = vector.extract_strided_slice %40 {offsets = [1, 0, 0], sizes = [1, 8, 32], strides = [1, 1, 1]} : vector<2x8x32xf32> to vector<1x8x32xf32>
    %215 = vector.shape_cast %214 : vector<1x8x32xf32> to vector<8x32xf32>
    %216 = vector.extract_strided_slice %215 {offsets = [0, 24], sizes = [8, 8], strides = [1, 1]} : vector<8x32xf32> to vector<8x8xf32>
    %217 = tpu.transpose %213, [1, 0] : vector<8x8xf32> -> vector<8x8xf32>
    %cst_51 = arith.constant dense<0.000000e+00> : vector<8x8xf32>
    %218 = tpu.matmul %210, %217, %cst_51 {dimension_numbers = #tpu.dot_dimension_numbers<[1], [0], [0], [1], [0, 0, 1, 1], [], []>} : vector<8x8xf32>, vector<8x8xf32>, vector<8x8xf32> -> vector<8x8xf32>
    %cst_52 = arith.constant dense<0xFF800000> : vector<8xf32>
    %219 = vector.multi_reduction <maximumf>, %218, %cst_52 [1] : vector<8x8xf32> to vector<8xf32>
    %220 = vector.shape_cast %219 : vector<8xf32> to vector<8x1xf32>
    %221 = vector.broadcast %220 : vector<8x1xf32> to vector<8x8xf32>
    %222 = arith.subf %218, %221 : vector<8x8xf32>
    %223 = math.exp %222 : vector<8x8xf32>
    %cst_53 = arith.constant dense<0.000000e+00> : vector<8xf32>
    %224 = vector.multi_reduction <add>, %223, %cst_53 [1] : vector<8x8xf32> to vector<8xf32>
    %225 = vector.shape_cast %224 : vector<8xf32> to vector<8x1xf32>
    %226 = tpu.reciprocal %225 {approx = true} : vector<8x1xf32> -> vector<8x1xf32>
    %227 = vector.broadcast %226 : vector<8x1xf32> to vector<8x8xf32>
    %228 = arith.mulf %223, %227 : vector<8x8xf32>
    %cst_54 = arith.constant dense<0.000000e+00> : vector<8x8xf32>
    %229 = tpu.matmul %228, %216, %cst_54 {dimension_numbers = #tpu.dot_dimension_numbers<[1], [0], [0], [1], [0, 0, 1, 1], [], []>} : vector<8x8xf32>, vector<8x8xf32>, vector<8x8xf32> -> vector<8x8xf32>
    %230 = tpu.concatenate %207, %229 in 0 : vector<8x8xf32>, vector<8x8xf32> -> vector<16x8xf32>
    %c24 = arith.constant 24 : index
    %c0_55 = arith.constant 0 : index
    %231 = vector.load %arg6[%c24, %c0_55] : memref<32x32xf32, #tpu.memory_space<vmem>>, vector<8x32xf32>
    %cst_56 = arith.constant dense<0.000000e+00> : vector<16x32xf32>
    %232 = tpu.matmul %230, %231, %cst_56 {dimension_numbers = #tpu.dot_dimension_numbers<[1], [0], [0], [1], [0, 0, 1, 1], [], []>} : vector<16x8xf32>, vector<8x32xf32>, vector<16x32xf32> -> vector<16x32xf32>
    %233 = arith.addf %185, %232 : vector<16x32xf32>
    %c0_57 = arith.constant 0 : index
    %c0_58 = arith.constant 0 : index
    %234 = vector.load %arg7[%c0_57, %c0_58] : memref<1x32xf32, #tpu.memory_space<vmem>>, vector<1x32xf32>
    %235 = vector.shape_cast %234 : vector<1x32xf32> to vector<32xf32>
    %236 = vector.shape_cast %235 : vector<32xf32> to vector<1x32xf32>
    %237 = vector.broadcast %236 : vector<1x32xf32> to vector<16x32xf32>
    %238 = arith.addf %233, %237 : vector<16x32xf32>
    %239 = arith.addf %1, %238 : vector<16x32xf32>
    %c0_59 = arith.constant 0 : index
    %c0_60 = arith.constant 0 : index
    %240 = vector.load %arg8[%c0_59, %c0_60] : memref<1x32xf32, #tpu.memory_space<vmem>>, vector<1x32xf32>
    %241 = vector.shape_cast %240 : vector<1x32xf32> to vector<32xf32>
    %c0_61 = arith.constant 0 : index
    %c0_62 = arith.constant 0 : index
    %242 = vector.load %arg9[%c0_61, %c0_62] : memref<1x32xf32, #tpu.memory_space<vmem>>, vector<1x32xf32>
    %243 = vector.shape_cast %242 : vector<1x32xf32> to vector<32xf32>
    %cst_63 = arith.constant dense<0.000000e+00> : vector<16xf32>
    %244 = vector.multi_reduction <add>, %239, %cst_63 [1] : vector<16x32xf32> to vector<16xf32>
    %245 = vector.shape_cast %244 : vector<16xf32> to vector<16x1xf32>
    %cst_64 = arith.constant 3.200000e+01 : f32
    %246 = vector.broadcast %cst_64 : f32 to vector<16x1xf32>
    %247 = arith.divf %245, %246 : vector<16x1xf32>
    %248 = vector.broadcast %247 : vector<16x1xf32> to vector<16x32xf32>
    %249 = arith.subf %239, %248 : vector<16x32xf32>
    %250 = arith.mulf %249, %249 : vector<16x32xf32>
    %cst_65 = arith.constant dense<0.000000e+00> : vector<16xf32>
    %251 = vector.multi_reduction <add>, %250, %cst_65 [1] : vector<16x32xf32> to vector<16xf32>
    %252 = vector.shape_cast %251 : vector<16xf32> to vector<16x1xf32>
    %cst_66 = arith.constant 3.200000e+01 : f32
    %253 = vector.broadcast %cst_66 : f32 to vector<16x1xf32>
    %254 = arith.divf %252, %253 : vector<16x1xf32>
    %cst_67 = arith.constant 9.99999974E-6 : f32
    %255 = vector.broadcast %cst_67 : f32 to vector<16x1xf32>
    %256 = arith.addf %254, %255 : vector<16x1xf32>
    %257 = math.rsqrt %256 : vector<16x1xf32>
    %258 = vector.broadcast %257 : vector<16x1xf32> to vector<16x32xf32>
    %259 = arith.mulf %249, %258 : vector<16x32xf32>
    %260 = vector.shape_cast %241 : vector<32xf32> to vector<1x32xf32>
    %261 = vector.broadcast %260 : vector<1x32xf32> to vector<16x32xf32>
    %262 = arith.mulf %259, %261 : vector<16x32xf32>
    %263 = vector.shape_cast %243 : vector<32xf32> to vector<1x32xf32>
    %264 = vector.broadcast %263 : vector<1x32xf32> to vector<16x32xf32>
    %265 = arith.addf %262, %264 : vector<16x32xf32>
    %c0_68 = arith.constant 0 : index
    %c0_69 = arith.constant 0 : index
    %266 = vector.load %arg10[%c0_68, %c0_69] : memref<32x128xf32, #tpu.memory_space<vmem>>, vector<32x128xf32>
    %cst_70 = arith.constant dense<0.000000e+00> : vector<16x128xf32>
    %267 = tpu.matmul %265, %266, %cst_70 {dimension_numbers = #tpu.dot_dimension_numbers<[1], [0], [0], [1], [0, 0, 1, 1], [], []>} : vector<16x32xf32>, vector<32x128xf32>, vector<16x128xf32> -> vector<16x128xf32>
    %c0_71 = arith.constant 0 : index
    %c0_72 = arith.constant 0 : index
    %268 = vector.load %arg11[%c0_71, %c0_72] : memref<1x128xf32, #tpu.memory_space<vmem>>, vector<1x128xf32>
    %269 = vector.shape_cast %268 : vector<1x128xf32> to vector<128xf32>
    %270 = vector.shape_cast %269 : vector<128xf32> to vector<1x128xf32>
    %271 = vector.broadcast %270 : vector<1x128xf32> to vector<16x128xf32>
    %272 = arith.addf %267, %271 : vector<16x128xf32>
    %cst_73 = arith.constant 1.702000e+00 : f32
    %273 = vector.broadcast %cst_73 : f32 to vector<16x128xf32>
    %274 = arith.mulf %273, %272 : vector<16x128xf32>
    %275 = arith.negf %274 : vector<16x128xf32>
    %276 = math.exp %275 : vector<16x128xf32>
    %cst_74 = arith.constant 1.000000e+00 : f32
    %277 = vector.broadcast %cst_74 : f32 to vector<16x128xf32>
    %278 = arith.addf %277, %276 : vector<16x128xf32>
    %279 = arith.divf %277, %278 : vector<16x128xf32>
    %280 = arith.mulf %272, %279 : vector<16x128xf32>
    %c0_75 = arith.constant 0 : index
    %c0_76 = arith.constant 0 : index
    %281 = vector.load %arg12[%c0_75, %c0_76] : memref<128x32xf32, #tpu.memory_space<vmem>>, vector<128x32xf32>
    %cst_77 = arith.constant dense<0.000000e+00> : vector<16x32xf32>
    %282 = tpu.matmul %280, %281, %cst_77 {dimension_numbers = #tpu.dot_dimension_numbers<[1], [0], [0], [1], [0, 0, 1, 1], [], []>} : vector<16x128xf32>, vector<128x32xf32>, vector<16x32xf32> -> vector<16x32xf32>
    %c0_78 = arith.constant 0 : index
    %c0_79 = arith.constant 0 : index
    %283 = vector.load %arg13[%c0_78, %c0_79] : memref<1x32xf32, #tpu.memory_space<vmem>>, vector<1x32xf32>
    %284 = vector.shape_cast %283 : vector<1x32xf32> to vector<32xf32>
    %285 = vector.shape_cast %284 : vector<32xf32> to vector<1x32xf32>
    %286 = vector.broadcast %285 : vector<1x32xf32> to vector<16x32xf32>
    %287 = arith.addf %282, %286 : vector<16x32xf32>
    %288 = arith.addf %239, %287 : vector<16x32xf32>
    %289 = vector.shape_cast %288 : vector<16x32xf32> to vector<2x8x32xf32>
    %c0_80 = arith.constant 0 : index
    %c0_81 = arith.constant 0 : index
    %c0_82 = arith.constant 0 : index
    %290 = vector.load %arg14[%c0_80, %c0_81, %c0_82] : memref<2x8x32xf32, #tpu.memory_space<vmem>>, vector<2x8x32xf32>
    tpu.vector_store %arg14[%c0_80, %c0_81, %c0_82], %289 {strides = array<i32>} : memref<2x8x32xf32, #tpu.memory_space<vmem>>, vector<2x8x32xf32>,
    return
  }
  func.func @transform_0(%arg0: i32) -> (i32, i32, i32) {
    %c0_i32 = arith.constant 0 : i32
    %c0_i32_0 = arith.constant 0 : i32
    %c0_i32_1 = arith.constant 0 : i32
    return %arg0, %c0_i32, %c0_i32_0 : i32, i32, i32
  }
  func.func @transform_1(%arg0: i32) -> (i32, i32) {
    %c0_i32 = arith.constant 0 : i32
    %c0_i32_0 = arith.constant 0 : i32
    %c0_i32_1 = arith.constant 0 : i32
    return %c0_i32, %c0_i32_0 : i32, i32
  }
  func.func @transform_2(%arg0: i32) -> (i32, i32) {
    %c0_i32 = arith.constant 0 : i32
    %c0_i32_0 = arith.constant 0 : i32
    %c0_i32_1 = arith.constant 0 : i32
    return %c0_i32, %c0_i32_0 : i32, i32
  }
  func.func @transform_3(%arg0: i32) -> (i32, i32) {
    %c0_i32 = arith.constant 0 : i32
    %c0_i32_0 = arith.constant 0 : i32
    %c0_i32_1 = arith.constant 0 : i32
    return %c0_i32, %c0_i32_0 : i32, i32
  }
  func.func @transform_4(%arg0: i32) -> (i32, i32) {
    %c0_i32 = arith.constant 0 : i32
    %c0_i32_0 = arith.constant 0 : i32
    %c0_i32_1 = arith.constant 0 : i32
    return %c0_i32, %c0_i32_0 : i32, i32
  }
  func.func @transform_5(%arg0: i32) -> (i32, i32) {
    %c0_i32 = arith.constant 0 : i32
    %c0_i32_0 = arith.constant 0 : i32
    %c0_i32_1 = arith.constant 0 : i32
    return %c0_i32, %c0_i32_0 : i32, i32
  }
  func.func @transform_6(%arg0: i32) -> (i32, i32) {
    %c0_i32 = arith.constant 0 : i32
    %c0_i32_0 = arith.constant 0 : i32
    %c0_i32_1 = arith.constant 0 : i32
    return %c0_i32, %c0_i32_0 : i32, i32
  }
  func.func @transform_7(%arg0: i32) -> (i32, i32) {
    %c0_i32 = arith.constant 0 : i32
    %c0_i32_0 = arith.constant 0 : i32
    %c0_i32_1 = arith.constant 0 : i32
    return %c0_i32, %c0_i32_0 : i32, i32
  }
  func.func @transform_8(%arg0: i32) -> (i32, i32) {
    %c0_i32 = arith.constant 0 : i32
    %c0_i32_0 = arith.constant 0 : i32
    %c0_i32_1 = arith.constant 0 : i32
    return %c0_i32, %c0_i32_0 : i32, i32
  }
  func.func @transform_9(%arg0: i32) -> (i32, i32) {
    %c0_i32 = arith.constant 0 : i32
    %c0_i32_0 = arith.constant 0 : i32
    %c0_i32_1 = arith.constant 0 : i32
    return %c0_i32, %c0_i32_0 : i32, i32
  }
  func.func @transform_10(%arg0: i32) -> (i32, i32) {
    %c0_i32 = arith.constant 0 : i32
    %c0_i32_0 = arith.constant 0 : i32
    %c0_i32_1 = arith.constant 0 : i32
    return %c0_i32, %c0_i32_0 : i32, i32
  }
  func.func @transform_11(%arg0: i32) -> (i32, i32) {
    %c0_i32 = arith.constant 0 : i32
    %c0_i32_0 = arith.constant 0 : i32
    %c0_i32_1 = arith.constant 0 : i32
    return %c0_i32, %c0_i32_0 : i32, i32
  }
  func.func @transform_12(%arg0: i32) -> (i32, i32) {
    %c0_i32 = arith.constant 0 : i32
    %c0_i32_0 = arith.constant 0 : i32
    %c0_i32_1 = arith.constant 0 : i32
    return %c0_i32, %c0_i32_0 : i32, i32
  }
  func.func @transform_13(%arg0: i32) -> (i32, i32, i32) {
    %c0_i32 = arith.constant 0 : i32
    %c0_i32_0 = arith.constant 0 : i32
    %c0_i32_1 = arith.constant 0 : i32
    return %arg0, %c0_i32, %c0_i32_0 : i32, i32, i32
  }
}

</mosaic_0001>

<llo_original>
// kernel: tpu_custom_call.1
$region0: #{tpu_custom_call.1}
  #allocation0 [shape = 'u32[]', space=smem, size = 0x4, offset = 0x4, fixed_abs, tag = 'smem constant byte address 0x4 - core index']
  #allocation1 [shape = 'u32[72,128]{1,0:T(1,128)}', space=vmem, size = 0x9000, scoped, tag = 'internal scratch']
  %s0 = inlined_call_operand.vmem [shape: f32[4,8,32], index: 0, kind: input, shape index: {}]
  %s1 = inlined_call_operand.vmem [shape: f32[1,32], index: 1, kind: input, shape index: {}]
  %s2 = inlined_call_operand.vmem [shape: f32[1,32], index: 2, kind: input, shape index: {}]
  %s3 = inlined_call_operand.vmem [shape: f32[32,96], index: 3, kind: input, shape index: {}]
  %s4 = inlined_call_operand.vmem [shape: f32[1,96], index: 4, kind: input, shape index: {}]
  %s5 = inlined_call_operand.vmem [shape: f32[32,32], index: 5, kind: input, shape index: {}]
  %s6 = inlined_call_operand.vmem [shape: f32[1,32], index: 6, kind: input, shape index: {}]
  %s7 = inlined_call_operand.vmem [shape: f32[1,32], index: 7, kind: input, shape index: {}]
  %s8 = inlined_call_operand.vmem [shape: f32[1,32], index: 8, kind: input, shape index: {}]
  %s9 = inlined_call_operand.vmem [shape: f32[32,128], index: 9, kind: input, shape index: {}]
  %s10 = inlined_call_operand.vmem [shape: f32[1,128], index: 10, kind: input, shape index: {}]
  %s11 = inlined_call_operand.vmem [shape: f32[128,32], index: 11, kind: input, shape index: {}]
  %s12 = inlined_call_operand.vmem [shape: f32[1,32], index: 12, kind: input, shape index: {}]
  %s13 = inlined_call_operand.hbm [shape: f32[4,8,32], index: 13, kind: output, shape index: {}]
  %s14 = sld [smem:[#allocation0]]
  $region85: #{tpu_custom_call.1} parent=0
    _
  %s16 = ssub.s32 1, %s14
  %s17 = scalar_select 0, %s16, %s14
  $region1: #{tpu_custom_call.1} parent=0
    #allocation2 [shape = 'u8[16384]{0}', space=vmem, size = 0x4000, scoped, tag = 'output window, operand 0']
    #allocation3 [shape = 's32[2]{0}', space=sflag, size = 0x8, scoped, tag = 'scoped memory for tpu_custom_call.1']
    %18 = vsyncpa [#allocation3], 0
    %s19 = scalar_lea.sflag [#allocation3], 1
    %20 = vsyncpa %s19, 0
    loop: start=0, step=1, limit=4
    $region2: #{tpu_custom_call.1} parent=1 // loop_pre_header
      _
    $region3: #{tpu_custom_call.1} parent=1 // loop_header
      %s22 = sphi 0, %s26
      %p23 = scmp.ge.s32.totalorder %s22, 4
      %s32 = sphi 0, %s34
      %s35 = sphi 0, %s32
      %s36 = sphi 0, %s35
      %s52 = sphi 0, %s36
      %s56 = sphi 0, %s56
      %s58 = sphi 0, %s56
      %s59 = sphi 0, %s58
      %s73 = sphi 0, %s59
      %s77 = sphi 0, %s77
      %s79 = sphi 0, %s77
      %s80 = sphi 0, %s79
      %s94 = sphi 0, %s80
      %s98 = sphi 0, %s98
      %s100 = sphi 0, %s98
      %s101 = sphi 0, %s100
      %s115 = sphi 0, %s101
      %s119 = sphi 0, %s119
      %s121 = sphi 0, %s119
      %s122 = sphi 0, %s121
      %s136 = sphi 0, %s122
      %s140 = sphi 0, %s140
      %s142 = sphi 0, %s140
      %s143 = sphi 0, %s142
      %s157 = sphi 0, %s143
      %s161 = sphi 0, %s161
      %s163 = sphi 0, %s161
      %s164 = sphi 0, %s163
      %s178 = sphi 0, %s164
      %s182 = sphi 0, %s182
      %s184 = sphi 0, %s182
      %s185 = sphi 0, %s184
      %s199 = sphi 0, %s185
      %s203 = sphi 0, %s203
      %s205 = sphi 0, %s203
      %s206 = sphi 0, %s205
      %s220 = sphi 0, %s206
      %s224 = sphi 0, %s224
      %s226 = sphi 0, %s224
      %s227 = sphi 0, %s226
      %s241 = sphi 0, %s227
      %s245 = sphi 0, %s245
      %s247 = sphi 0, %s245
      %s248 = sphi 0, %s247
      %s262 = sphi 0, %s248
      %s266 = sphi 0, %s266
      %s268 = sphi 0, %s266
      %s269 = sphi 0, %s268
      %s283 = sphi 0, %s269
      %s287 = sphi 0, %s287
      %s289 = sphi 0, %s287
      %s290 = sphi 0, %s289
      %s304 = sphi 0, %s290
      %s310 = sphi 0, %s312
      %s313 = sphi 0, %s310
      %s314 = sphi 0, %s313
      %s330 = sphi 0, %s314
    $region4: #{tpu_custom_call.1} parent=1 // loop_header_branch
      %25 = sbr.rel (%p23) target = $region8
    $region5: #{tpu_custom_call.1} parent=1 // loop_body
      %s27 = ssub.s32 %s22, 1
      %s28 = ssub.s32 %s22, 2
      %s29 = sadd.s32 %s22, 1
      %s30 = ssub.s32 %s22, %s29
      %p31 = scmp.eq.s32.totalorder %s30, 0
      %s33 = sadd.s32 %s32, 1
      %s34 = scalar_select %p31, %s32, %s33
      %p37 = pneg %p31
      %p38 = scmp.eq.s32.totalorder %s22, 1
      %p39 = por %p37, %p38
      %p40 = scmp.ne.s32.totalorder %s32, %s35
      %p41 = scmp.eq.s32.totalorder %s22, 0
      %p42 = por %p40, %p41
      %p43 = scmp.ne.s32.totalorder %s32, %s35
      %p44 = scmp.eq.s32.totalorder %s27, 1
      %p45 = por %p43, %p44
      %p46 = scmp.ne.s32.totalorder %s35, %s36
      %p47 = scmp.eq.s32.totalorder %s27, 0
      %p48 = por %p46, %p47
      %p49 = scmp.ne.s32.totalorder %s35, %s36
      %p50 = scmp.eq.s32.totalorder %s28, 1
      %p51 = por %p49, %p50
      %p53 = scmp.ne.s32.totalorder %s36, %s52
      %p54 = scmp.eq.s32.totalorder %s28, 0
      %p55 = por %p53, %p54
      %s57 = sadd.s32 %s56, 1
      %p60 = scmp.eq.s32.totalorder %s22, 1
      %p61 = scmp.ne.s32.totalorder %s56, %s58
      %p62 = scmp.eq.s32.totalorder %s22, 0
      %p63 = por %p61, %p62
      %p64 = scmp.ne.s32.totalorder %s56, %s58
      %p65 = scmp.eq.s32.totalorder %s27, 1
      %p66 = por %p64, %p65
      %p67 = scmp.ne.s32.totalorder %s58, %s59
      %p68 = scmp.eq.s32.totalorder %s27, 0
      %p69 = por %p67, %p68
      %p70 = scmp.ne.s32.totalorder %s58, %s59
      %p71 = scmp.eq.s32.totalorder %s28, 1
      %p72 = por %p70, %p71
      %p74 = scmp.ne.s32.totalorder %s59, %s73
      %p75 = scmp.eq.s32.totalorder %s28, 0
      %p76 = por %p74, %p75
      %s78 = sadd.s32 %s77, 1
      %p81 = scmp.eq.s32.totalorder %s22, 1
      %p82 = scmp.ne.s32.totalorder %s77, %s79
      %p83 = scmp.eq.s32.totalorder %s22, 0
      %p84 = por %p82, %p83
      %p85 = scmp.ne.s32.totalorder %s77, %s79
      %p86 = scmp.eq.s32.totalorder %s27, 1
      %p87 = por %p85, %p86
      %p88 = scmp.ne.s32.totalorder %s79, %s80
      %p89 = scmp.eq.s32.totalorder %s27, 0
      %p90 = por %p88, %p89
      %p91 = scmp.ne.s32.totalorder %s79, %s80
      %p92 = scmp.eq.s32.totalorder %s28, 1
      %p93 = por %p91, %p92
      %p95 = scmp.ne.s32.totalorder %s80, %s94
      %p96 = scmp.eq.s32.totalorder %s28, 0
      %p97 = por %p95, %p96
      %s99 = sadd.s32 %s98, 1
      %p102 = scmp.eq.s32.totalorder %s22, 1
      %p103 = scmp.ne.s32.totalorder %s98, %s100
      %p104 = scmp.eq.s32.totalorder %s22, 0
      %p105 = por %p103, %p104
      %p106 = scmp.ne.s32.totalorder %s98, %s100
      %p107 = scmp.eq.s32.totalorder %s27, 1
      %p108 = por %p106, %p107
      %p109 = scmp.ne.s32.totalorder %s100, %s101
      %p110 = scmp.eq.s32.totalorder %s27, 0
      %p111 = por %p109, %p110
      %p112 = scmp.ne.s32.totalorder %s100, %s101
      %p113 = scmp.eq.s32.totalorder %s28, 1
      %p114 = por %p112, %p113
      %p116 = scmp.ne.s32.totalorder %s101, %s115
      %p117 = scmp.eq.s32.totalorder %s28, 0
      %p118 = por %p116, %p117
      %s120 = sadd.s32 %s119, 1
      %p123 = scmp.eq.s32.totalorder %s22, 1
      %p124 = scmp.ne.s32.totalorder %s119, %s121
      %p125 = scmp.eq.s32.totalorder %s22, 0
      %p126 = por %p124, %p125
      %p127 = scmp.ne.s32.totalorder %s119, %s121
      %p128 = scmp.eq.s32.totalorder %s27, 1
      %p129 = por %p127, %p128
      %p130 = scmp.ne.s32.totalorder %s121, %s122
      %p131 = scmp.eq.s32.totalorder %s27, 0
      %p132 = por %p130, %p131
      %p133 = scmp.ne.s32.totalorder %s121, %s122
      %p134 = scmp.eq.s32.totalorder %s28, 1
      %p135 = por %p133, %p134
      %p137 = scmp.ne.s32.totalorder %s122, %s136
      %p138 = scmp.eq.s32.totalorder %s28, 0
      %p139 = por %p137, %p138
      %s141 = sadd.s32 %s140, 1
      %p144 = scmp.eq.s32.totalorder %s22, 1
      %p145 = scmp.ne.s32.totalorder %s140, %s142
      %p146 = scmp.eq.s32.totalorder %s22, 0
      %p147 = por %p145, %p146
      %p148 = scmp.ne.s32.totalorder %s140, %s142
      %p149 = scmp.eq.s32.totalorder %s27, 1
      %p150 = por %p148, %p149
      %p151 = scmp.ne.s32.totalorder %s142, %s143
      %p152 = scmp.eq.s32.totalorder %s27, 0
      %p153 = por %p151, %p152
      %p154 = scmp.ne.s32.totalorder %s142, %s143
      %p155 = scmp.eq.s32.totalorder %s28, 1
      %p156 = por %p154, %p155
      %p158 = scmp.ne.s32.totalorder %s143, %s157
      %p159 = scmp.eq.s32.totalorder %s28, 0
      %p160 = por %p158, %p159
      %s162 = sadd.s32 %s161, 1
      %p165 = scmp.eq.s32.totalorder %s22, 1
      %p166 = scmp.ne.s32.totalorder %s161, %s163
      %p167 = scmp.eq.s32.totalorder %s22, 0
      %p168 = por %p166, %p167
      %p169 = scmp.ne.s32.totalorder %s161, %s163
      %p170 = scmp.eq.s32.totalorder %s27, 1
      %p171 = por %p169, %p170
      %p172 = scmp.ne.s32.totalorder %s163, %s164
      %p173 = scmp.eq.s32.totalorder %s27, 0
      %p174 = por %p172, %p173
      %p175 = scmp.ne.s32.totalorder %s163, %s164
      %p176 = scmp.eq.s32.totalorder %s28, 1
      %p177 = por %p175, %p176
      %p179 = scmp.ne.s32.totalorder %s164, %s178
      %p180 = scmp.eq.s32.totalorder %s28, 0
      %p181 = por %p179, %p180
      %s183 = sadd.s32 %s182, 1
      %p186 = scmp.eq.s32.totalorder %s22, 1
      %p187 = scmp.ne.s32.totalorder %s182, %s184
      %p188 = scmp.eq.s32.totalorder %s22, 0
      %p189 = por %p187, %p188
      %p190 = scmp.ne.s32.totalorder %s182, %s184
      %p191 = scmp.eq.s32.totalorder %s27, 1
      %p192 = por %p190, %p191
      %p193 = scmp.ne.s32.totalorder %s184, %s185
      %p194 = scmp.eq.s32.totalorder %s27, 0
      %p195 = por %p193, %p194
      %p196 = scmp.ne.s32.totalorder %s184, %s185
      %p197 = scmp.eq.s32.totalorder %s28, 1
      %p198 = por %p196, %p197
      %p200 = scmp.ne.s32.totalorder %s185, %s199
      %p201 = scmp.eq.s32.totalorder %s28, 0
      %p202 = por %p200, %p201
      %s204 = sadd.s32 %s203, 1
      %p207 = scmp.eq.s32.totalorder %s22, 1
      %p208 = scmp.ne.s32.totalorder %s203, %s205
      %p209 = scmp.eq.s32.totalorder %s22, 0
      %p210 = por %p208, %p209
      %p211 = scmp.ne.s32.totalorder %s203, %s205
      %p212 = scmp.eq.s32.totalorder %s27, 1
      %p213 = por %p211, %p212
      %p214 = scmp.ne.s32.totalorder %s205, %s206
      %p215 = scmp.eq.s32.totalorder %s27, 0
      %p216 = por %p214, %p215
      %p217 = scmp.ne.s32.totalorder %s205, %s206
      %p218 = scmp.eq.s32.totalorder %s28, 1
      %p219 = por %p217, %p218
      %p221 = scmp.ne.s32.totalorder %s206, %s220
      %p222 = scmp.eq.s32.totalorder %s28, 0
      %p223 = por %p221, %p222
      %s225 = sadd.s32 %s224, 1
      %p228 = scmp.eq.s32.totalorder %s22, 1
      %p229 = scmp.ne.s32.totalorder %s224, %s226
      %p230 = scmp.eq.s32.totalorder %s22, 0
      %p231 = por %p229, %p230
      %p232 = scmp.ne.s32.totalorder %s224, %s226
      %p233 = scmp.eq.s32.totalorder %s27, 1
      %p234 = por %p232, %p233
      %p235 = scmp.ne.s32.totalorder %s226, %s227
      %p236 = scmp.eq.s32.totalorder %s27, 0
      %p237 = por %p235, %p236
      %p238 = scmp.ne.s32.totalorder %s226, %s227
      %p239 = scmp.eq.s32.totalorder %s28, 1
      %p240 = por %p238, %p239
      %p242 = scmp.ne.s32.totalorder %s227, %s241
      %p243 = scmp.eq.s32.totalorder %s28, 0
      %p244 = por %p242, %p243
      %s246 = sadd.s32 %s245, 1
      %p249 = scmp.eq.s32.totalorder %s22, 1
      %p250 = scmp.ne.s32.totalorder %s245, %s247
      %p251 = scmp.eq.s32.totalorder %s22, 0
      %p252 = por %p250, %p251
      %p253 = scmp.ne.s32.totalorder %s245, %s247
      %p254 = scmp.eq.s32.totalorder %s27, 1
      %p255 = por %p253, %p254
      %p256 = scmp.ne.s32.totalorder %s247, %s248
      %p257 = scmp.eq.s32.totalorder %s27, 0
      %p258 = por %p256, %p257
      %p259 = scmp.ne.s32.totalorder %s247, %s248
      %p260 = scmp.eq.s32.totalorder %s28, 1
      %p261 = por %p259, %p260
      %p263 = scmp.ne.s32.totalorder %s248, %s262
      %p264 = scmp.eq.s32.totalorder %s28, 0
      %p265 = por %p263, %p264
      %s267 = sadd.s32 %s266, 1
      %p270 = scmp.eq.s32.totalorder %s22, 1
      %p271 = scmp.ne.s32.totalorder %s266, %s268
      %p272 = scmp.eq.s32.totalorder %s22, 0
      %p273 = por %p271, %p272
      %p274 = scmp.ne.s32.totalorder %s266, %s268
      %p275 = scmp.eq.s32.totalorder %s27, 1
      %p276 = por %p274, %p275
      %p277 = scmp.ne.s32.totalorder %s268, %s269
      %p278 = scmp.eq.s32.totalorder %s27, 0
      %p279 = por %p277, %p278
      %p280 = scmp.ne.s32.totalorder %s268, %s269
      %p281 = scmp.eq.s32.totalorder %s28, 1
      %p282 = por %p280, %p281
      %p284 = scmp.ne.s32.totalorder %s269, %s283
      %p285 = scmp.eq.s32.totalorder %s28, 0
      %p286 = por %p284, %p285
      %s288 = sadd.s32 %s287, 1
      %p291 = scmp.eq.s32.totalorder %s22, 1
      %p292 = scmp.ne.s32.totalorder %s287, %s289
      %p293 = scmp.eq.s32.totalorder %s22, 0
      %p294 = por %p292, %p293
      %p295 = scmp.ne.s32.totalorder %s287, %s289
      %p296 = scmp.eq.s32.totalorder %s27, 1
      %p297 = por %p295, %p296
      %p298 = scmp.ne.s32.totalorder %s289, %s290
      %p299 = scmp.eq.s32.totalorder %s27, 0
      %p300 = por %p298, %p299
      %p301 = scmp.ne.s32.totalorder %s289, %s290
      %p302 = scmp.eq.s32.totalorder %s28, 1
      %p303 = por %p301, %p302
      %p305 = scmp.ne.s32.totalorder %s290, %s304
      %p306 = scmp.eq.s32.totalorder %s28, 0
      %p307 = por %p305, %p306
      %s308 = ssub.s32 %s22, %s29
      %p309 = scmp.eq.s32.totalorder %s308, 0
      %s311 = sadd.s32 %s310, 1
      %s312 = scalar_select %p309, %s310, %s311
      %p315 = pneg %p309
      %p316 = scmp.eq.s32.totalorder %s22, 1
      %p317 = por %p315, %p316
      %p318 = scmp.ne.s32.totalorder %s310, %s313
      %p319 = scmp.eq.s32.totalorder %s22, 0
      %p320 = por %p318, %p319
      %p321 = scmp.ne.s32.totalorder %s310, %s313
      %p322 = scmp.eq.s32.totalorder %s27, 1
      %p323 = por %p321, %p322
      %p324 = scmp.ne.s32.totalorder %s313, %s314
      %p325 = scmp.eq.s32.totalorder %s27, 0
      %p326 = por %p324, %p325
      %p327 = scmp.ne.s32.totalorder %s313, %s314
      %p328 = scmp.eq.s32.totalorder %s28, 1
      %p329 = por %p327, %p328
      %p331 = scmp.ne.s32.totalorder %s314, %s330
      %p332 = scmp.eq.s32.totalorder %s28, 0
      %p333 = por %p331, %p332
      %p334 = scmp.le.s32.totalorder 1, %s22
      %p335 = scmp.lt.s32.totalorder %s22, 3
      %p336 = pnand %p334, %p335
      %p337 = pneg %p336
      // Predicated region
      $region9: #{tpu_custom_call.1} parent=5 // pred_check
        _
      $region10: #{tpu_custom_call.1} parent=5 // pred_check_branch
        %339 = sbr.rel (%p336) target = $region12
      $region11: #{tpu_custom_call.1} parent=5 // pred_region
        %s340 = ssub.s32 %s22, 1
        // Predicated region
        $region13: #{tpu_custom_call.1} parent=11 // pred_check
          %p341 = pneg %p69
        $region14: #{tpu_custom_call.1} parent=11 // pred_check_branch
          %343 = sbr.rel (%p341) target = $region16
        $region15: #{tpu_custom_call.1} parent=11 // pred_region
          _
        $region16: #{tpu_custom_call.1} parent=11 // pred_fallthru
          _
        // Predicated region
        $region17: #{tpu_custom_call.1} parent=11 // pred_check
          %p344 = pneg %p90
        $region18: #{tpu_custom_call.1} parent=11 // pred_check_branch
          %346 = sbr.rel (%p344) target = $region20
        $region19: #{tpu_custom_call.1} parent=11 // pred_region
          _
        $region20: #{tpu_custom_call.1} parent=11 // pred_fallthru
          _
        // Predicated region
        $region21: #{tpu_custom_call.1} parent=11 // pred_check
          %p347 = pneg %p111
        $region22: #{tpu_custom_call.1} parent=11 // pred_check_branch
          %349 = sbr.rel (%p347) target = $region24
        $region23: #{tpu_custom_call.1} parent=11 // pred_region
          _
        $region24: #{tpu_custom_call.1} parent=11 // pred_fallthru
          _
        // Predicated region
        $region25: #{tpu_custom_call.1} parent=11 // pred_check
          %p350 = pneg %p132
        $region26: #{tpu_custom_call.1} parent=11 // pred_check_branch
          %352 = sbr.rel (%p350) target = $region28
        $region27: #{tpu_custom_call.1} parent=11 // pred_region
          _
        $region28: #{tpu_custom_call.1} parent=11 // pred_fallthru
          _
        // Predicated region
        $region29: #{tpu_custom_call.1} parent=11 // pred_check
          %p353 = pneg %p153
        $region30: #{tpu_custom_call.1} parent=11 // pred_check_branch
          %355 = sbr.rel (%p353) target = $region32
        $region31: #{tpu_custom_call.1} parent=11 // pred_region
          _
        $region32: #{tpu_custom_call.1} parent=11 // pred_fallthru
          _
        // Predicated region
        $region33: #{tpu_custom_call.1} parent=11 // pred_check
          %p356 = pneg %p174
        $region34: #{tpu_custom_call.1} parent=11 // pred_check_branch
          %358 = sbr.rel (%p356) target = $region36
        $region35: #{tpu_custom_call.1} parent=11 // pred_region
          _
        $region36: #{tpu_custom_call.1} parent=11 // pred_fallthru
          _
        // Predicated region
        $region37: #{tpu_custom_call.1} parent=11 // pred_check
          %p359 = pneg %p195
        $region38: #{tpu_custom_call.1} parent=11 // pred_check_branch
          %361 = sbr.rel (%p359) target = $region40
        $region39: #{tpu_custom_call.1} parent=11 // pred_region
          _
        $region40: #{tpu_custom_call.1} parent=11 // pred_fallthru
          _
        // Predicated region
        $region41: #{tpu_custom_call.1} parent=11 // pred_check
          %p362 = pneg %p216
        $region42: #{tpu_custom_call.1} parent=11 // pred_check_branch
          %364 = sbr.rel (%p362) target = $region44
        $region43: #{tpu_custom_call.1} parent=11 // pred_region
          _
        $region44: #{tpu_custom_call.1} parent=11 // pred_fallthru
          _
        // Predicated region
        $region45: #{tpu_custom_call.1} parent=11 // pred_check
          %p365 = pneg %p237
        $region46: #{tpu_custom_call.1} parent=11 // pred_check_branch
          %367 = sbr.rel (%p365) target = $region48
        $region47: #{tpu_custom_call.1} parent=11 // pred_region
          _
        $region48: #{tpu_custom_call.1} parent=11 // pred_fallthru
          _
        // Predicated region
        $region49: #{tpu_custom_call.1} parent=11 // pred_check
          %p368 = pneg %p258
        $region50: #{tpu_custom_call.1} parent=11 // pred_check_branch
          %370 = sbr.rel (%p368) target = $region52
        $region51: #{tpu_custom_call.1} parent=11 // pred_region
          _
        $region52: #{tpu_custom_call.1} parent=11 // pred_fallthru
          _
        // Predicated region
        $region53: #{tpu_custom_call.1} parent=11 // pred_check
          %p371 = pneg %p279
        $region54: #{tpu_custom_call.1} parent=11 // pred_check_branch
          %373 = sbr.rel (%p371) target = $region56
        $region55: #{tpu_custom_call.1} parent=11 // pred_region
          _
        $region56: #{tpu_custom_call.1} parent=11 // pred_fallthru
          _
        // Predicated region
        $region57: #{tpu_custom_call.1} parent=11 // pred_check
          %p374 = pneg %p300
        $region58: #{tpu_custom_call.1} parent=11 // pred_check_branch
          %376 = sbr.rel (%p374) target = $region60
        $region59: #{tpu_custom_call.1} parent=11 // pred_region
          _
        $region60: #{tpu_custom_call.1} parent=11 // pred_fallthru
          _
      $region12: #{tpu_custom_call.1} parent=5 // pred_fallthru
        _
      %p377 = scmp.lt.s32.totalorder %s22, 2
      // Predicated region
      $region61: #{tpu_custom_call.1} parent=5 // pred_check
        %p378 = pneg %p377
      $region62: #{tpu_custom_call.1} parent=5 // pred_check_branch
        %380 = sbr.rel (%p378) target = $region64
      $region63: #{tpu_custom_call.1} parent=5 // pred_region
        // Predicated region
        $region65: #{tpu_custom_call.1} parent=63 // pred_check
          %p381 = pneg %p42
        $region66: #{tpu_custom_call.1} parent=63 // pred_check_branch
          %383 = sbr.rel (%p381) target = $region68
        $region67: #{tpu_custom_call.1} parent=63 // pred_region
          %s384 = smul.u32 2, %s22
          %p385 = scmp.lt.s32.totalorder %s384, 3
          %s386 = scalar_select %p385, %s384, 3
          %s387 = smul.addr %s386, 8
          %s388 = scalar_lea.vmem %s0, %s387
          %s389 = smul.u32 2, %s22
        $region68: #{tpu_custom_call.1} parent=63 // pred_fallthru
          _
      $region64: #{tpu_custom_call.1} parent=5 // pred_fallthru
        _
      %p390 = scmp.le.s32.totalorder 1, %s22
      %p391 = scmp.lt.s32.totalorder %s22, 3
      %p392 = pnand %p390, %p391
      %p393 = pneg %p392
      // Predicated region
      $region69: #{tpu_custom_call.1} parent=5 // pred_check
        _
      $region70: #{tpu_custom_call.1} parent=5 // pred_check_branch
        %395 = sbr.rel (%p392) target = $region72
      $region71: #{tpu_custom_call.1} parent=5 // pred_region
        %s396 = ssub.s32 %s22, 1
        %s397 = smul.u32 2, %s27
        %p398 = scmp.lt.s32.totalorder %s397, 3
        %s399 = scalar_select %p398, %s397, 3
        %s400 = smul.addr %s399, 8
        %s401 = scalar_lea.vmem %s0, %s400
        %p402 = pneg %p48
        %p403 = pneg %p45
        %p404 = pneg %p69
        %p405 = pneg %p66
        %p406 = pneg %p90
        %p407 = pneg %p87
        %p408 = pneg %p111
        %p409 = pneg %p108
        %p410 = pneg %p132
        %p411 = pneg %p129
        %p412 = pneg %p153
        %p413 = pneg %p150
        %p414 = pneg %p174
        %p415 = pneg %p171
        %p416 = pneg %p195
        %p417 = pneg %p192
        %p418 = pneg %p216
        %p419 = pneg %p213
        %p420 = pneg %p237
        %p421 = pneg %p234
        %p422 = pneg %p258
        %p423 = pneg %p255
        %p424 = pneg %p279
        %p425 = pneg %p276
        %p426 = pneg %p300
        %p427 = pneg %p297
        %p428 = pneg %p326
        %p429 = pneg %p323
        %s430 = sand.u32 %s313, 1
        %s431 = scalar_lea.sflag [#allocation3], %s430
        %s432 = sand.u32 %s313, 1
        %s433 = smul.addr %s432, 16
        %s434 = scalar_lea.vmem [#allocation2], %s433
        %s435 = smul.u32 2, %s27
        %p436 = scmp.lt.s32.totalorder %s435, 3
        %s437 = scalar_select %p436, %s435, 3
        %s438 = smul.addr %s437, 8
        %s439 = scalar_lea.vmem %s0, %s438
        %s440 = smul.u32 2, %s27
        %s441 = smul.u32 2, %s27
        %v442 = vld [vmem:[%s439] sm:$0xff]
        %v443 = vld [vmem:[%s439 + $0x8] sm:$0xff]
        %v444 = vld [vmem:[%s1] sm:$0x1]
        %v445 = vld [vmem:[%s2] sm:$0x1]
        %vm446 = vcmask 261120
        %v447 = vsel %vm446, %v442, 0.0
        %448 = vadd.xlane.f32.xlu0 %v447
        %v449 = vpop.xlane.xlu0 %448
        %v450 = vsel %vm446, %v443, 0.0
        %451 = vadd.xlane.f32.xlu0 %v450
        %v452 = vpop.xlane.xlu0 %451
        %v453 = vrcp.pop 32.0
        %v454 = vmul.f32 32.0, %v453
        %v455 = vsub.f32 1.0, %v454
        %v456 = vmul.f32 %v453, %v455
        %v457 = vadd.f32 %v453, %v456
        %vm458 = vweird.f32 %v453
        %v459 = vsel %vm458, %v453, %v457
        %v460 = vmul.f32 %v449, %v459
        %v461 = vmul.f32 %v452, %v459
        %v462 = vsub.f32 %v442, %v460
        %v463 = vsub.f32 %v443, %v461
        %v464 = vmul.f32 %v462, %v462
        %v465 = vmul.f32 %v463, %v463
        %v466 = vsel %vm446, %v464, 0.0
        %467 = vadd.xlane.f32.xlu0 %v466
        %v468 = vpop.xlane.xlu0 %467
        %v469 = vsel %vm446, %v465, 0.0
        %470 = vadd.xlane.f32.xlu0 %v469
        %v471 = vpop.xlane.xlu0 %470
        %v472 = vmul.f32 %v468, %v459
        %v473 = vmul.f32 %v471, %v459
        %v474 = vadd.f32 %v472, 1e-05
        %v475 = vadd.f32 %v473, 1e-05
        %v476 = vrsqrt.pop %v474
        %v477 = vmul.f32 %v476, %v474
        %v478 = vmul.f32 %v477, %v476
        %v479 = vmul.f32 0.5, %v478
        %v480 = vsub.f32 1.5, %v479
        %v481 = vmul.f32 %v476, %v480
        %vm482 = vweird.f32 %v474
        %vm483 = vweird.f32 %v476
        %vm484 = vmor %vm482, %vm483
        %v485 = vsel %vm484, %v476, %v481
        %v486 = vrsqrt.pop %v475
        %v487 = vmul.f32 %v486, %v475
        %v488 = vmul.f32 %v487, %v486
        %v489 = vmul.f32 0.5, %v488
        %v490 = vsub.f32 1.5, %v489
        %v491 = vmul.f32 %v486, %v490
        %vm492 = vweird.f32 %v475
        %vm493 = vweird.f32 %v486
        %vm494 = vmor %vm492, %vm493
        %v495 = vsel %vm494, %v486, %v491
        %v496 = vmul.f32 %v462, %v485
        %v497 = vmul.f32 %v463, %v495
        %v499 = vperm.slane %v444, 0
        %v501 = vmul.f32 %v496, %v499
        %v502 = vmul.f32 %v497, %v499
        %v504 = vperm.slane %v445, 0
        %v506 = vadd.f32 %v501, %v504
        %v507 = vadd.f32 %v502, %v504
        %v508 = vld [vmem:[%s3] sm:$0xff]
        %v509 = vld [vmem:[%s3 + $0x8] sm:$0xff]
        %v510 = vld [vmem:[%s3 + $0x10] sm:$0xff]
        %v511 = vld [vmem:[%s3 + $0x18] sm:$0xff]
        %v512 = vld [vmem:[%s4] sm:$0x1]
        %v514 = vperm.slane %v512, 0
        %v517 = vsel %vm446, %v506, 0
        %v520 = vsel %vm446, %v507, 0
        %522 = vmatpush.msra.mxu0 0.0
        %523 = vmatpush.msra.mxu0 0.0
        %524 = vmatpush.msra.mxu0 0.0
        %525 = vmatpush.msra.mxu0 0.0
        %526 = vmatpush.msra.mxu0 0.0
        %527 = vmatpush.msra.mxu0 0.0
        %528 = vmatpush.msra.mxu0 0.0
        %529 = vmatpush.msra.mxu0 0.0
        %530 = vmatpush.msra.mxu0 0.0
        %531 = vmatpush.msra.mxu0 0.0
        %532 = vmatpush.msra.mxu0 0.0
        %533 = vmatpush.msra.mxu0 0.0
        %534 = vmatpush.msra.mxu0 %v511
        %535 = vmatpush.msra.mxu0 %v510
        %536 = vmatpush.msra.mxu0 %v509
        %537 = vmatpush.msra.mxu0 %v508
        %538 = vmatmul.f32.gmra.mxu0 %v517
        %v539 = vpop.f32.mrf.mxu0
        %v540 = vadd.f32 %v514, %v539
        %541 = vmatmul.f32.gmra.mxu0 %v520
        %v542 = vpop.f32.mrf.mxu0
        %v543 = vadd.f32 %v514, %v542
        %544 = vdwg.mxu0
        %546 = vrot.lane.b32.xlu0 %v540, 96
        %v547 = vpop.permute.xlu0 %546
        %vm548 = vcmask 64512
        %v549 = vsel %vm548, %v540, 0
        %v551 = vsel %vm548, %v547, 0
        %553 = vmatpush.xpose.msra.mxu0 0.0
        %554 = vmatpush.xpose.msra.mxu0 0.0
        %555 = vmatpush.xpose.msra.mxu0 0.0
        %556 = vmatpush.xpose.msra.mxu0 0.0
        %557 = vmatpush.xpose.msra.mxu0 0.0
        %558 = vmatpush.xpose.msra.mxu0 0.0
        %559 = vmatpush.xpose.msra.mxu0 0.0
        %560 = vmatpush.xpose.msra.mxu0 0.0
        %561 = vmatpush.xpose.msra.mxu0 0.0
        %562 = vmatpush.xpose.msra.mxu0 0.0
        %563 = vmatpush.xpose.msra.mxu0 0.0
        %564 = vmatpush.xpose.msra.mxu0 0.0
        %565 = vmatpush.xpose.msra.mxu0 0.0
        %566 = vmatpush.xpose.msra.mxu0 0.0
        %567 = vmatpush.xpose.msra.mxu0 0.0
        %568 = vmatpush.xpose.msra.mxu0 %v551
        %569 = vmatmul.f32.gmra.mxu0 %v549
        %v570 = vpop.f32.mrf.mxu0
        %v571 = vadd.f32 0.0, %v570
        %572 = vdwg.mxu0
        %v573 = vsel %vm548, %v571, -inf
        %574 = vmax.xlane.f32.xlu0 %v573
        %v575 = vpop.xlane.xlu0 %574
        %v576 = vsub.f32 %v571, %v575
        %v577 = vmul.f32 %v576, 1.442695
        %v578 = vpow.pop %v577
        %v579 = vsel %vm548, %v578, 0.0
        %580 = vadd.xlane.f32.xlu0 %v579
        %v581 = vpop.xlane.xlu0 %580
        %v582 = vrcp.pop %v581
        %v583 = vmul.f32 %v578, %v582
        %584 = vrot.lane.b32.xlu0 %v540, 64
        %v585 = vpop.permute.xlu0 %584
        %v588 = vsel %vm548, %v583, 0
        %590 = vmatpush.msra.mxu0 0.0
        %591 = vmatpush.msra.mxu0 0.0
        %592 = vmatpush.msra.mxu0 0.0
        %593 = vmatpush.msra.mxu0 0.0
        %594 = vmatpush.msra.mxu0 0.0
        %595 = vmatpush.msra.mxu0 0.0
        %596 = vmatpush.msra.mxu0 0.0
        %597 = vmatpush.msra.mxu0 0.0
        %598 = vmatpush.msra.mxu0 0.0
        %599 = vmatpush.msra.mxu0 0.0
        %600 = vmatpush.msra.mxu0 0.0
        %601 = vmatpush.msra.mxu0 0.0
        %602 = vmatpush.msra.mxu0 0.0
        %603 = vmatpush.msra.mxu0 0.0
        %604 = vmatpush.msra.mxu0 0.0
        %605 = vmatpush.msra.mxu0 %v585
        %606 = vmatmul.f32.gmra.mxu0 %v588
        %v607 = vpop.f32.mrf.mxu0
        %v608 = vadd.f32 0.0, %v607
        %609 = vdwg.mxu0
        %611 = vrot.lane.b32.xlu0 %v543, 96
        %v612 = vpop.permute.xlu0 %611
        %v613 = vsel %vm548, %v543, 0
        %v615 = vsel %vm548, %v612, 0
        %617 = vmatpush.xpose.msra.mxu0 0.0
        %618 = vmatpush.xpose.msra.mxu0 0.0
        %619 = vmatpush.xpose.msra.mxu0 0.0
        %620 = vmatpush.xpose.msra.mxu0 0.0
        %621 = vmatpush.xpose.msra.mxu0 0.0
        %622 = vmatpush.xpose.msra.mxu0 0.0
        %623 = vmatpush.xpose.msra.mxu0 0.0
        %624 = vmatpush.xpose.msra.mxu0 0.0
        %625 = vmatpush.xpose.msra.mxu0 0.0
        %626 = vmatpush.xpose.msra.mxu0 0.0
        %627 = vmatpush.xpose.msra.mxu0 0.0
        %628 = vmatpush.xpose.msra.mxu0 0.0
        %629 = vmatpush.xpose.msra.mxu0 0.0
        %630 = vmatpush.xpose.msra.mxu0 0.0
        %631 = vmatpush.xpose.msra.mxu0 0.0
        %632 = vmatpush.xpose.msra.mxu0 %v615
        %633 = vmatmul.f32.gmra.mxu0 %v613
        %v634 = vpop.f32.mrf.mxu0
        %v635 = vadd.f32 0.0, %v634
        %636 = vdwg.mxu0
        %v637 = vsel %vm548, %v635, -inf
        %638 = vmax.xlane.f32.xlu0 %v637
        %v639 = vpop.xlane.xlu0 %638
        %v640 = vsub.f32 %v635, %v639
        %v641 = vmul.f32 %v640, 1.442695
        %v642 = vpow.pop %v641
        %v643 = vsel %vm548, %v642, 0.0
        %644 = vadd.xlane.f32.xlu0 %v643
        %v645 = vpop.xlane.xlu0 %644
        %v646 = vrcp.pop %v645
        %v647 = vmul.f32 %v642, %v646
        %648 = vrot.lane.b32.xlu0 %v543, 64
        %v649 = vpop.permute.xlu0 %648
        %v652 = vsel %vm548, %v647, 0
        %654 = vmatpush.msra.mxu0 0.0
        %655 = vmatpush.msra.mxu0 0.0
        %656 = vmatpush.msra.mxu0 0.0
        %657 = vmatpush.msra.mxu0 0.0
        %658 = vmatpush.msra.mxu0 0.0
        %659 = vmatpush.msra.mxu0 0.0
        %660 = vmatpush.msra.mxu0 0.0
        %661 = vmatpush.msra.mxu0 0.0
        %662 = vmatpush.msra.mxu0 0.0
        %663 = vmatpush.msra.mxu0 0.0
        %664 = vmatpush.msra.mxu0 0.0
        %665 = vmatpush.msra.mxu0 0.0
        %666 = vmatpush.msra.mxu0 0.0
        %667 = vmatpush.msra.mxu0 0.0
        %668 = vmatpush.msra.mxu0 0.0
        %669 = vmatpush.msra.mxu0 %v649
        %670 = vmatmul.f32.gmra.mxu0 %v652
        %v671 = vpop.f32.mrf.mxu0
        %v672 = vadd.f32 0.0, %v671
        %673 = vdwg.mxu0
        %v674 = vld [vmem:[%s5] sm:$0xff]
        %675 = vrot.lane.b32.xlu0 %v540, 120
        %v676 = vpop.permute.xlu0 %675
        %677 = vrot.lane.b32.xlu0 %v540, 88
        %v678 = vpop.permute.xlu0 %677
        %v679 = vsel %vm548, %v676, 0
        %v681 = vsel %vm548, %v678, 0
        %683 = vmatpush.xpose.msra.mxu0 0.0
        %684 = vmatpush.xpose.msra.mxu0 0.0
        %685 = vmatpush.xpose.msra.mxu0 0.0
        %686 = vmatpush.xpose.msra.mxu0 0.0
        %687 = vmatpush.xpose.msra.mxu0 0.0
        %688 = vmatpush.xpose.msra.mxu0 0.0
        %689 = vmatpush.xpose.msra.mxu0 0.0
        %690 = vmatpush.xpose.msra.mxu0 0.0
        %691 = vmatpush.xpose.msra.mxu0 0.0
        %692 = vmatpush.xpose.msra.mxu0 0.0
        %693 = vmatpush.xpose.msra.mxu0 0.0
        %694 = vmatpush.xpose.msra.mxu0 0.0
        %695 = vmatpush.xpose.msra.mxu0 0.0
        %696 = vmatpush.xpose.msra.mxu0 0.0
        %697 = vmatpush.xpose.msra.mxu0 0.0
        %698 = vmatpush.xpose.msra.mxu0 %v681
        %699 = vmatmul.f32.gmra.mxu0 %v679
        %v700 = vpop.f32.mrf.mxu0
        %v701 = vadd.f32 0.0, %v700
        %702 = vdwg.mxu0
        %v703 = vsel %vm548, %v701, -inf
        %704 = vmax.xlane.f32.xlu0 %v703
        %v705 = vpop.xlane.xlu0 %704
        %v706 = vsub.f32 %v701, %v705
        %v707 = vmul.f32 %v706, 1.442695
        %v708 = vpow.pop %v707
        %v709 = vsel %vm548, %v708, 0.0
        %710 = vadd.xlane.f32.xlu0 %v709
        %v711 = vpop.xlane.xlu0 %710
        %v712 = vrcp.pop %v711
        %v713 = vmul.f32 %v708, %v712
        %714 = vrot.lane.b32.xlu0 %v540, 56
        %v715 = vpop.permute.xlu0 %714
        %v718 = vsel %vm548, %v713, 0
        %720 = vmatpush.msra.mxu0 0.0
        %721 = vmatpush.msra.mxu0 0.0
        %722 = vmatpush.msra.mxu0 0.0
        %723 = vmatpush.msra.mxu0 0.0
        %724 = vmatpush.msra.mxu0 0.0
        %725 = vmatpush.msra.mxu0 0.0
        %726 = vmatpush.msra.mxu0 0.0
        %727 = vmatpush.msra.mxu0 0.0
        %728 = vmatpush.msra.mxu0 0.0
        %729 = vmatpush.msra.mxu0 0.0
        %730 = vmatpush.msra.mxu0 0.0
        %731 = vmatpush.msra.mxu0 0.0
        %732 = vmatpush.msra.mxu0 0.0
        %733 = vmatpush.msra.mxu0 0.0
        %734 = vmatpush.msra.mxu0 0.0
        %735 = vmatpush.msra.mxu0 %v715
        %736 = vmatmul.f32.gmra.mxu0 %v718
        %v737 = vpop.f32.mrf.mxu0
        %v738 = vadd.f32 0.0, %v737
        %739 = vdwg.mxu0
        %740 = vrot.lane.b32.xlu0 %v543, 120
        %v741 = vpop.permute.xlu0 %740
        %742 = vrot.lane.b32.xlu0 %v543, 88
        %v743 = vpop.permute.xlu0 %742
        %v744 = vsel %vm548, %v741, 0
        %v746 = vsel %vm548, %v743, 0
        %748 = vmatpush.xpose.msra.mxu0 0.0
        %749 = vmatpush.xpose.msra.mxu0 0.0
        %750 = vmatpush.xpose.msra.mxu0 0.0
        %751 = vmatpush.xpose.msra.mxu0 0.0
        %752 = vmatpush.xpose.msra.mxu0 0.0
        %753 = vmatpush.xpose.msra.mxu0 0.0
        %754 = vmatpush.xpose.msra.mxu0 0.0
        %755 = vmatpush.xpose.msra.mxu0 0.0
        %756 = vmatpush.xpose.msra.mxu0 0.0
        %757 = vmatpush.xpose.msra.mxu0 0.0
        %758 = vmatpush.xpose.msra.mxu0 0.0
        %759 = vmatpush.xpose.msra.mxu0 0.0
        %760 = vmatpush.xpose.msra.mxu0 0.0
        %761 = vmatpush.xpose.msra.mxu0 0.0
        %762 = vmatpush.xpose.msra.mxu0 0.0
        %763 = vmatpush.xpose.msra.mxu0 %v746
        %764 = vmatmul.f32.gmra.mxu0 %v744
        %v765 = vpop.f32.mrf.mxu0
        %v766 = vadd.f32 0.0, %v765
        %767 = vdwg.mxu0
        %v768 = vsel %vm548, %v766, -inf
        %769 = vmax.xlane.f32.xlu0 %v768
        %v770 = vpop.xlane.xlu0 %769
        %v771 = vsub.f32 %v766, %v770
        %v772 = vmul.f32 %v771, 1.442695
        %v773 = vpow.pop %v772
        %v774 = vsel %vm548, %v773, 0.0
        %775 = vadd.xlane.f32.xlu0 %v774
        %v776 = vpop.xlane.xlu0 %775
        %v777 = vrcp.pop %v776
        %v778 = vmul.f32 %v773, %v777
        %779 = vrot.lane.b32.xlu0 %v543, 56
        %v780 = vpop.permute.xlu0 %779
        %v783 = vsel %vm548, %v778, 0
        %785 = vmatpush.msra.mxu0 0.0
        %786 = vmatpush.msra.mxu0 0.0
        %787 = vmatpush.msra.mxu0 0.0
        %788 = vmatpush.msra.mxu0 0.0
        %789 = vmatpush.msra.mxu0 0.0
        %790 = vmatpush.msra.mxu0 0.0
        %791 = vmatpush.msra.mxu0 0.0
        %792 = vmatpush.msra.mxu0 0.0
        %793 = vmatpush.msra.mxu0 0.0
        %794 = vmatpush.msra.mxu0 0.0
        %795 = vmatpush.msra.mxu0 0.0
        %796 = vmatpush.msra.mxu0 0.0
        %797 = vmatpush.msra.mxu0 0.0
        %798 = vmatpush.msra.mxu0 0.0
        %799 = vmatpush.msra.mxu0 0.0
        %800 = vmatpush.msra.mxu0 %v780
        %801 = vmatmul.f32.gmra.mxu0 %v783
        %v802 = vpop.f32.mrf.mxu0
        %v803 = vadd.f32 0.0, %v802
        %804 = vdwg.mxu0
        %v805 = vld [vmem:[%s5 + $0x8] sm:$0xff]
        %v807 = vsel %vm548, %v738, 0
        %v810 = vsel %vm548, %v803, 0
        %812 = vmatpush.msra.mxu0 0.0
        %813 = vmatpush.msra.mxu0 0.0
        %814 = vmatpush.msra.mxu0 0.0
        %815 = vmatpush.msra.mxu0 0.0
        %816 = vmatpush.msra.mxu0 0.0
        %817 = vmatpush.msra.mxu0 0.0
        %818 = vmatpush.msra.mxu0 0.0
        %819 = vmatpush.msra.mxu0 0.0
        %820 = vmatpush.msra.mxu0 0.0
        %821 = vmatpush.msra.mxu0 0.0
        %822 = vmatpush.msra.mxu0 0.0
        %823 = vmatpush.msra.mxu0 0.0
        %824 = vmatpush.msra.mxu0 0.0
        %825 = vmatpush.msra.mxu0 0.0
        %826 = vmatpush.msra.mxu0 0.0
        %827 = vmatpush.msra.mxu0 %v805
        %828 = vmatmul.f32.gmra.mxu0 %v807
        %v829 = vpop.f32.mrf.mxu0
        %v830 = vadd.f32 0.0, %v829
        %831 = vmatmul.f32.gmra.mxu0 %v810
        %v832 = vpop.f32.mrf.mxu0
        %v833 = vadd.f32 0.0, %v832
        %834 = vdwg.mxu0
        %v836 = vsel %vm548, %v608, 0
        %v839 = vsel %vm548, %v672, 0
        %841 = vmatpush.msra.mxu0 0.0
        %842 = vmatpush.msra.mxu0 0.0
        %843 = vmatpush.msra.mxu0 0.0
        %844 = vmatpush.msra.mxu0 0.0
        %845 = vmatpush.msra.mxu0 0.0
        %846 = vmatpush.msra.mxu0 0.0
        %847 = vmatpush.msra.mxu0 0.0
        %848 = vmatpush.msra.mxu0 0.0
        %849 = vmatpush.msra.mxu0 0.0
        %850 = vmatpush.msra.mxu0 0.0
        %851 = vmatpush.msra.mxu0 0.0
        %852 = vmatpush.msra.mxu0 0.0
        %853 = vmatpush.msra.mxu0 0.0
        %854 = vmatpush.msra.mxu0 0.0
        %855 = vmatpush.msra.mxu0 0.0
        %856 = vmatpush.msra.mxu0 %v674
        %857 = vmatmul.f32.gmra.mxu0 %v836
        %v858 = vpop.f32.mrf.mxu0
        %v859 = vadd.f32 %v830, %v858
        %860 = vmatmul.f32.gmra.mxu0 %v839
        %v861 = vpop.f32.mrf.mxu0
        %v862 = vadd.f32 %v833, %v861
        %863 = vdwg.mxu0
        %864 = vrot.lane.b32.xlu0 %v540, 112
        %v865 = vpop.permute.xlu0 %864
        %866 = vrot.lane.b32.xlu0 %v540, 80
        %v867 = vpop.permute.xlu0 %866
        %v868 = vsel %vm548, %v865, 0
        %v870 = vsel %vm548, %v867, 0
        %872 = vmatpush.xpose.msra.mxu0 0.0
        %873 = vmatpush.xpose.msra.mxu0 0.0
        %874 = vmatpush.xpose.msra.mxu0 0.0
        %875 = vmatpush.xpose.msra.mxu0 0.0
        %876 = vmatpush.xpose.msra.mxu0 0.0
        %877 = vmatpush.xpose.msra.mxu0 0.0
        %878 = vmatpush.xpose.msra.mxu0 0.0
        %879 = vmatpush.xpose.msra.mxu0 0.0
        %880 = vmatpush.xpose.msra.mxu0 0.0
        %881 = vmatpush.xpose.msra.mxu0 0.0
        %882 = vmatpush.xpose.msra.mxu0 0.0
        %883 = vmatpush.xpose.msra.mxu0 0.0
        %884 = vmatpush.xpose.msra.mxu0 0.0
        %885 = vmatpush.xpose.msra.mxu0 0.0
        %886 = vmatpush.xpose.msra.mxu0 0.0
        %887 = vmatpush.xpose.msra.mxu0 %v870
        %888 = vmatmul.f32.gmra.mxu0 %v868
        %v889 = vpop.f32.mrf.mxu0
        %v890 = vadd.f32 0.0, %v889
        %891 = vdwg.mxu0
        %v892 = vsel %vm548, %v890, -inf
        %893 = vmax.xlane.f32.xlu0 %v892
        %v894 = vpop.xlane.xlu0 %893
        %v895 = vsub.f32 %v890, %v894
        %v896 = vmul.f32 %v895, 1.442695
        %v897 = vpow.pop %v896
        %v898 = vsel %vm548, %v897, 0.0
        %899 = vadd.xlane.f32.xlu0 %v898
        %v900 = vpop.xlane.xlu0 %899
        %v901 = vrcp.pop %v900
        %v902 = vmul.f32 %v897, %v901
        %903 = vrot.lane.b32.xlu0 %v540, 48
        %v904 = vpop.permute.xlu0 %903
        %v907 = vsel %vm548, %v902, 0
        %909 = vmatpush.msra.mxu0 0.0
        %910 = vmatpush.msra.mxu0 0.0
        %911 = vmatpush.msra.mxu0 0.0
        %912 = vmatpush.msra.mxu0 0.0
        %913 = vmatpush.msra.mxu0 0.0
        %914 = vmatpush.msra.mxu0 0.0
        %915 = vmatpush.msra.mxu0 0.0
        %916 = vmatpush.msra.mxu0 0.0
        %917 = vmatpush.msra.mxu0 0.0
        %918 = vmatpush.msra.mxu0 0.0
        %919 = vmatpush.msra.mxu0 0.0
        %920 = vmatpush.msra.mxu0 0.0
        %921 = vmatpush.msra.mxu0 0.0
        %922 = vmatpush.msra.mxu0 0.0
        %923 = vmatpush.msra.mxu0 0.0
        %924 = vmatpush.msra.mxu0 %v904
        %925 = vmatmul.f32.gmra.mxu0 %v907
        %v926 = vpop.f32.mrf.mxu0
        %v927 = vadd.f32 0.0, %v926
        %928 = vdwg.mxu0
        %929 = vrot.lane.b32.xlu0 %v543, 112
        %v930 = vpop.permute.xlu0 %929
        %931 = vrot.lane.b32.xlu0 %v543, 80
        %v932 = vpop.permute.xlu0 %931
        %v933 = vsel %vm548, %v930, 0
        %v935 = vsel %vm548, %v932, 0
        %937 = vmatpush.xpose.msra.mxu0 0.0
        %938 = vmatpush.xpose.msra.mxu0 0.0
        %939 = vmatpush.xpose.msra.mxu0 0.0
        %940 = vmatpush.xpose.msra.mxu0 0.0
        %941 = vmatpush.xpose.msra.mxu0 0.0
        %942 = vmatpush.xpose.msra.mxu0 0.0
        %943 = vmatpush.xpose.msra.mxu0 0.0
        %944 = vmatpush.xpose.msra.mxu0 0.0
        %945 = vmatpush.xpose.msra.mxu0 0.0
        %946 = vmatpush.xpose.msra.mxu0 0.0
        %947 = vmatpush.xpose.msra.mxu0 0.0
        %948 = vmatpush.xpose.msra.mxu0 0.0
        %949 = vmatpush.xpose.msra.mxu0 0.0
        %950 = vmatpush.xpose.msra.mxu0 0.0
        %951 = vmatpush.xpose.msra.mxu0 0.0
        %952 = vmatpush.xpose.msra.mxu0 %v935
        %953 = vmatmul.f32.gmra.mxu0 %v933
        %v954 = vpop.f32.mrf.mxu0
        %v955 = vadd.f32 0.0, %v954
        %956 = vdwg.mxu0
        %v957 = vsel %vm548, %v955, -inf
        %958 = vmax.xlane.f32.xlu0 %v957
        %v959 = vpop.xlane.xlu0 %958
        %v960 = vsub.f32 %v955, %v959
        %v961 = vmul.f32 %v960, 1.442695
        %v962 = vpow.pop %v961
        %v963 = vsel %vm548, %v962, 0.0
        %964 = vadd.xlane.f32.xlu0 %v963
        %v965 = vpop.xlane.xlu0 %964
        %v966 = vrcp.pop %v965
        %v967 = vmul.f32 %v962, %v966
        %968 = vrot.lane.b32.xlu0 %v543, 48
        %v969 = vpop.permute.xlu0 %968
        %v972 = vsel %vm548, %v967, 0
        %974 = vmatpush.msra.mxu0 0.0
        %975 = vmatpush.msra.mxu0 0.0
        %976 = vmatpush.msra.mxu0 0.0
        %977 = vmatpush.msra.mxu0 0.0
        %978 = vmatpush.msra.mxu0 0.0
        %979 = vmatpush.msra.mxu0 0.0
        %980 = vmatpush.msra.mxu0 0.0
        %981 = vmatpush.msra.mxu0 0.0
        %982 = vmatpush.msra.mxu0 0.0
        %983 = vmatpush.msra.mxu0 0.0
        %984 = vmatpush.msra.mxu0 0.0
        %985 = vmatpush.msra.mxu0 0.0
        %986 = vmatpush.msra.mxu0 0.0
        %987 = vmatpush.msra.mxu0 0.0
        %988 = vmatpush.msra.mxu0 0.0
        %989 = vmatpush.msra.mxu0 %v969
        %990 = vmatmul.f32.gmra.mxu0 %v972
        %v991 = vpop.f32.mrf.mxu0
        %v992 = vadd.f32 0.0, %v991
        %993 = vdwg.mxu0
        %v994 = vld [vmem:[%s5 + $0x10] sm:$0xff]
        %v996 = vsel %vm548, %v927, 0
        %v999 = vsel %vm548, %v992, 0
        %1001 = vmatpush.msra.mxu0 0.0
        %1002 = vmatpush.msra.mxu0 0.0
        %1003 = vmatpush.msra.mxu0 0.0
        %1004 = vmatpush.msra.mxu0 0.0
        %1005 = vmatpush.msra.mxu0 0.0
        %1006 = vmatpush.msra.mxu0 0.0
        %1007 = vmatpush.msra.mxu0 0.0
        %1008 = vmatpush.msra.mxu0 0.0
        %1009 = vmatpush.msra.mxu0 0.0
        %1010 = vmatpush.msra.mxu0 0.0
        %1011 = vmatpush.msra.mxu0 0.0
        %1012 = vmatpush.msra.mxu0 0.0
        %1013 = vmatpush.msra.mxu0 0.0
        %1014 = vmatpush.msra.mxu0 0.0
        %1015 = vmatpush.msra.mxu0 0.0
        %1016 = vmatpush.msra.mxu0 %v994
        %1017 = vmatmul.f32.gmra.mxu0 %v996
        %v1018 = vpop.f32.mrf.mxu0
        %v1019 = vadd.f32 0.0, %v1018
        %1020 = vmatmul.f32.gmra.mxu0 %v999
        %v1021 = vpop.f32.mrf.mxu0
        %v1022 = vadd.f32 0.0, %v1021
        %1023 = vdwg.mxu0
        %v1024 = vadd.f32 %v859, %v1019
        %v1025 = vadd.f32 %v862, %v1022
        %1026 = vrot.lane.b32.xlu0 %v540, 104
        %v1027 = vpop.permute.xlu0 %1026
        %1028 = vrot.lane.b32.xlu0 %v540, 72
        %v1029 = vpop.permute.xlu0 %1028
        %v1030 = vsel %vm548, %v1027, 0
        %v1032 = vsel %vm548, %v1029, 0
        %1034 = vmatpush.xpose.msra.mxu0 0.0
        %1035 = vmatpush.xpose.msra.mxu0 0.0
        %1036 = vmatpush.xpose.msra.mxu0 0.0
        %1037 = vmatpush.xpose.msra.mxu0 0.0
        %1038 = vmatpush.xpose.msra.mxu0 0.0
        %1039 = vmatpush.xpose.msra.mxu0 0.0
        %1040 = vmatpush.xpose.msra.mxu0 0.0
        %1041 = vmatpush.xpose.msra.mxu0 0.0
        %1042 = vmatpush.xpose.msra.mxu0 0.0
        %1043 = vmatpush.xpose.msra.mxu0 0.0
        %1044 = vmatpush.xpose.msra.mxu0 0.0
        %1045 = vmatpush.xpose.msra.mxu0 0.0
        %1046 = vmatpush.xpose.msra.mxu0 0.0
        %1047 = vmatpush.xpose.msra.mxu0 0.0
        %1048 = vmatpush.xpose.msra.mxu0 0.0
        %1049 = vmatpush.xpose.msra.mxu0 %v1032
        %1050 = vmatmul.f32.gmra.mxu0 %v1030
        %v1051 = vpop.f32.mrf.mxu0
        %v1052 = vadd.f32 0.0, %v1051
        %1053 = vdwg.mxu0
        %v1054 = vsel %vm548, %v1052, -inf
        %1055 = vmax.xlane.f32.xlu0 %v1054
        %v1056 = vpop.xlane.xlu0 %1055
        %v1057 = vsub.f32 %v1052, %v1056
        %v1058 = vmul.f32 %v1057, 1.442695
        %v1059 = vpow.pop %v1058
        %v1060 = vsel %vm548, %v1059, 0.0
        %1061 = vadd.xlane.f32.xlu0 %v1060
        %v1062 = vpop.xlane.xlu0 %1061
        %v1063 = vrcp.pop %v1062
        %v1064 = vmul.f32 %v1059, %v1063
        %1065 = vrot.lane.b32.xlu0 %v540, 40
        %v1066 = vpop.permute.xlu0 %1065
        %v1069 = vsel %vm548, %v1064, 0
        %1071 = vmatpush.msra.mxu0 0.0
        %1072 = vmatpush.msra.mxu0 0.0
        %1073 = vmatpush.msra.mxu0 0.0
        %1074 = vmatpush.msra.mxu0 0.0
        %1075 = vmatpush.msra.mxu0 0.0
        %1076 = vmatpush.msra.mxu0 0.0
        %1077 = vmatpush.msra.mxu0 0.0
        %1078 = vmatpush.msra.mxu0 0.0
        %1079 = vmatpush.msra.mxu0 0.0
        %1080 = vmatpush.msra.mxu0 0.0
        %1081 = vmatpush.msra.mxu0 0.0
        %1082 = vmatpush.msra.mxu0 0.0
        %1083 = vmatpush.msra.mxu0 0.0
        %1084 = vmatpush.msra.mxu0 0.0
        %1085 = vmatpush.msra.mxu0 0.0
        %1086 = vmatpush.msra.mxu0 %v1066
        %1087 = vmatmul.f32.gmra.mxu0 %v1069
        %v1088 = vpop.f32.mrf.mxu0
        %v1089 = vadd.f32 0.0, %v1088
        %1090 = vdwg.mxu0
        %1091 = vrot.lane.b32.xlu0 %v543, 104
        %v1092 = vpop.permute.xlu0 %1091
        %1093 = vrot.lane.b32.xlu0 %v543, 72
        %v1094 = vpop.permute.xlu0 %1093
        %v1095 = vsel %vm548, %v1092, 0
        %v1097 = vsel %vm548, %v1094, 0
        %1099 = vmatpush.xpose.msra.mxu0 0.0
        %1100 = vmatpush.xpose.msra.mxu0 0.0
        %1101 = vmatpush.xpose.msra.mxu0 0.0
        %1102 = vmatpush.xpose.msra.mxu0 0.0
        %1103 = vmatpush.xpose.msra.mxu0 0.0
        %1104 = vmatpush.xpose.msra.mxu0 0.0
        %1105 = vmatpush.xpose.msra.mxu0 0.0
        %1106 = vmatpush.xpose.msra.mxu0 0.0
        %1107 = vmatpush.xpose.msra.mxu0 0.0
        %1108 = vmatpush.xpose.msra.mxu0 0.0
        %1109 = vmatpush.xpose.msra.mxu0 0.0
        %1110 = vmatpush.xpose.msra.mxu0 0.0
        %1111 = vmatpush.xpose.msra.mxu0 0.0
        %1112 = vmatpush.xpose.msra.mxu0 0.0
        %1113 = vmatpush.xpose.msra.mxu0 0.0
        %1114 = vmatpush.xpose.msra.mxu0 %v1097
        %1115 = vmatmul.f32.gmra.mxu0 %v1095
        %v1116 = vpop.f32.mrf.mxu0
        %v1117 = vadd.f32 0.0, %v1116
        %1118 = vdwg.mxu0
        %v1119 = vsel %vm548, %v1117, -inf
        %1120 = vmax.xlane.f32.xlu0 %v1119
        %v1121 = vpop.xlane.xlu0 %1120
        %v1122 = vsub.f32 %v1117, %v1121
        %v1123 = vmul.f32 %v1122, 1.442695
        %v1124 = vpow.pop %v1123
        %v1125 = vsel %vm548, %v1124, 0.0
        %1126 = vadd.xlane.f32.xlu0 %v1125
        %v1127 = vpop.xlane.xlu0 %1126
        %v1128 = vrcp.pop %v1127
        %v1129 = vmul.f32 %v1124, %v1128
        %1130 = vrot.lane.b32.xlu0 %v543, 40
        %v1131 = vpop.permute.xlu0 %1130
        %v1134 = vsel %vm548, %v1129, 0
        %1136 = vmatpush.msra.mxu0 0.0
        %1137 = vmatpush.msra.mxu0 0.0
        %1138 = vmatpush.msra.mxu0 0.0
        %1139 = vmatpush.msra.mxu0 0.0
        %1140 = vmatpush.msra.mxu0 0.0
        %1141 = vmatpush.msra.mxu0 0.0
        %1142 = vmatpush.msra.mxu0 0.0
        %1143 = vmatpush.msra.mxu0 0.0
        %1144 = vmatpush.msra.mxu0 0.0
        %1145 = vmatpush.msra.mxu0 0.0
        %1146 = vmatpush.msra.mxu0 0.0
        %1147 = vmatpush.msra.mxu0 0.0
        %1148 = vmatpush.msra.mxu0 0.0
        %1149 = vmatpush.msra.mxu0 0.0
        %1150 = vmatpush.msra.mxu0 0.0
        %1151 = vmatpush.msra.mxu0 %v1131
        %1152 = vmatmul.f32.gmra.mxu0 %v1134
        %v1153 = vpop.f32.mrf.mxu0
        %v1154 = vadd.f32 0.0, %v1153
        %1155 = vdwg.mxu0
        %v1156 = vld [vmem:[%s5 + $0x18] sm:$0xff]
        %v1158 = vsel %vm548, %v1089, 0
        %v1161 = vsel %vm548, %v1154, 0
        %1163 = vmatpush.msra.mxu0 0.0
        %1164 = vmatpush.msra.mxu0 0.0
        %1165 = vmatpush.msra.mxu0 0.0
        %1166 = vmatpush.msra.mxu0 0.0
        %1167 = vmatpush.msra.mxu0 0.0
        %1168 = vmatpush.msra.mxu0 0.0
        %1169 = vmatpush.msra.mxu0 0.0
        %1170 = vmatpush.msra.mxu0 0.0
        %1171 = vmatpush.msra.mxu0 0.0
        %1172 = vmatpush.msra.mxu0 0.0
        %1173 = vmatpush.msra.mxu0 0.0
        %1174 = vmatpush.msra.mxu0 0.0
        %1175 = vmatpush.msra.mxu0 0.0
        %1176 = vmatpush.msra.mxu0 0.0
        %1177 = vmatpush.msra.mxu0 0.0
        %1178 = vmatpush.msra.mxu0 %v1156
        %1179 = vmatmul.f32.gmra.mxu0 %v1158
        %v1180 = vpop.f32.mrf.mxu0
        %v1181 = vadd.f32 0.0, %v1180
        %1182 = vmatmul.f32.gmra.mxu0 %v1161
        %v1183 = vpop.f32.mrf.mxu0
        %v1184 = vadd.f32 0.0, %v1183
        %1185 = vdwg.mxu0
        %v1186 = vadd.f32 %v1024, %v1181
        %v1187 = vadd.f32 %v1025, %v1184
        %v1188 = vld [vmem:[%s6] sm:$0x1]
        %v1190 = vperm.slane %v1188, 0
        %v1192 = vadd.f32 %v1186, %v1190
        %v1193 = vadd.f32 %v1187, %v1190
        %v1194 = vadd.f32 %v442, %v1192
        %v1195 = vadd.f32 %v443, %v1193
        %v1196 = vld [vmem:[%s7] sm:$0x1]
        %v1197 = vld [vmem:[%s8] sm:$0x1]
        %v1198 = vsel %vm446, %v1194, 0.0
        %1199 = vadd.xlane.f32.xlu0 %v1198
        %v1200 = vpop.xlane.xlu0 %1199
        %v1201 = vsel %vm446, %v1195, 0.0
        %1202 = vadd.xlane.f32.xlu0 %v1201
        %v1203 = vpop.xlane.xlu0 %1202
        %v1204 = vmul.f32 %v1200, %v459
        %v1205 = vmul.f32 %v1203, %v459
        %v1206 = vsub.f32 %v1194, %v1204
        %v1207 = vsub.f32 %v1195, %v1205
        %v1208 = vmul.f32 %v1206, %v1206
        %v1209 = vmul.f32 %v1207, %v1207
        %v1210 = vsel %vm446, %v1208, 0.0
        %1211 = vadd.xlane.f32.xlu0 %v1210
        %v1212 = vpop.xlane.xlu0 %1211
        %v1213 = vsel %vm446, %v1209, 0.0
        %1214 = vadd.xlane.f32.xlu0 %v1213
        %v1215 = vpop.xlane.xlu0 %1214
        %v1216 = vmul.f32 %v1212, %v459
        %v1217 = vmul.f32 %v1215, %v459
        %v1218 = vadd.f32 %v1216, 1e-05
        %v1219 = vadd.f32 %v1217, 1e-05
        %v1220 = vrsqrt.pop %v1218
        %v1221 = vmul.f32 %v1220, %v1218
        %v1222 = vmul.f32 %v1221, %v1220
        %v1223 = vmul.f32 0.5, %v1222
        %v1224 = vsub.f32 1.5, %v1223
        %v1225 = vmul.f32 %v1220, %v1224
        %vm1226 = vweird.f32 %v1218
        %vm1227 = vweird.f32 %v1220
        %vm1228 = vmor %vm1226, %vm1227
        %v1229 = vsel %vm1228, %v1220, %v1225
        %v1230 = vrsqrt.pop %v1219
        %v1231 = vmul.f32 %v1230, %v1219
        %v1232 = vmul.f32 %v1231, %v1230
        %v1233 = vmul.f32 0.5, %v1232
        %v1234 = vsub.f32 1.5, %v1233
        %v1235 = vmul.f32 %v1230, %v1234
        %vm1236 = vweird.f32 %v1219
        %vm1237 = vweird.f32 %v1230
        %vm1238 = vmor %vm1236, %vm1237
        %v1239 = vsel %vm1238, %v1230, %v1235
        %v1240 = vmul.f32 %v1206, %v1229
        %v1241 = vmul.f32 %v1207, %v1239
        %v1243 = vperm.slane %v1196, 0
        %v1245 = vmul.f32 %v1240, %v1243
        %v1246 = vmul.f32 %v1241, %v1243
        %v1248 = vperm.slane %v1197, 0
        %v1250 = vadd.f32 %v1245, %v1248
        %v1251 = vadd.f32 %v1246, %v1248
        %v1252 = vld [vmem:[%s9] sm:$0xff]
        %v1253 = vld [vmem:[%s9 + $0x8] sm:$0xff]
        %v1254 = vld [vmem:[%s9 + $0x10] sm:$0xff]
        %v1255 = vld [vmem:[%s9 + $0x18] sm:$0xff]
        %v1256 = vld [vmem:[%s10] sm:$0x1]
        %v1258 = vperm.slane %v1256, 0
        %v1261 = vsel %vm446, %v1250, 0
        %v1264 = vsel %vm446, %v1251, 0
        %1266 = vmatpush.msra.mxu0 0.0
        %1267 = vmatpush.msra.mxu0 0.0
        %1268 = vmatpush.msra.mxu0 0.0
        %1269 = vmatpush.msra.mxu0 0.0
        %1270 = vmatpush.msra.mxu0 0.0
        %1271 = vmatpush.msra.mxu0 0.0
        %1272 = vmatpush.msra.mxu0 0.0
        %1273 = vmatpush.msra.mxu0 0.0
        %1274 = vmatpush.msra.mxu0 0.0
        %1275 = vmatpush.msra.mxu0 0.0
        %1276 = vmatpush.msra.mxu0 0.0
        %1277 = vmatpush.msra.mxu0 0.0
        %1278 = vmatpush.msra.mxu0 %v1255
        %1279 = vmatpush.msra.mxu0 %v1254
        %1280 = vmatpush.msra.mxu0 %v1253
        %1281 = vmatpush.msra.mxu0 %v1252
        %1282 = vmatmul.f32.gmra.mxu0 %v1261
        %v1283 = vpop.f32.mrf.mxu0
        %v1284 = vadd.f32 %v1258, %v1283
        %1285 = vmatmul.f32.gmra.mxu0 %v1264
        %v1286 = vpop.f32.mrf.mxu0
        %v1287 = vadd.f32 %v1258, %v1286
        %1288 = vdwg.mxu0
        %v1289 = vmul.f32 %v1284, 1.702
        %v1290 = vmul.f32 %v1287, 1.702
        %v1291 = vxor.u32 %v1289, 2147483648
        %v1292 = vxor.u32 %v1290, 2147483648
        %v1293 = vmul.f32 %v1291, 1.442695
        %v1294 = vpow.pop %v1293
        %v1295 = vmul.f32 %v1292, 1.442695
        %v1296 = vpow.pop %v1295
        %v1297 = vadd.f32 %v1294, 1.0
        %v1298 = vadd.f32 %v1296, 1.0
        %v1299 = vrcp.pop %v1297
        %v1300 = vmul.f32 %v1297, %v1299
        %v1301 = vsub.f32 1.0, %v1300
        %v1302 = vmul.f32 %v1299, %v1301
        %v1303 = vadd.f32 %v1299, %v1302
        %vm1304 = vweird.f32 %v1297
        %vm1305 = vweird.f32 %v1299
        %vm1306 = vmor %vm1304, %vm1305
        %v1307 = vsel %vm1306, %v1299, %v1303
        %v1308 = vand.u32 2147483647, %v1297
        %vm1309 = vcmp.eq.f32.partialorder %v1308, 8.507059e+37
        %v1310 = vand.u32 %v1297, 2147483648
        %v1311 = vor.u32 1.1754944e-38, %v1310
        %v1312 = vsel %vm1309, %v1311, %v1307
        %v1313 = vmul.f32 1.0, %v1312
        %v1314 = vrcp.pop %v1298
        %v1315 = vmul.f32 %v1298, %v1314
        %v1316 = vsub.f32 1.0, %v1315
        %v1317 = vmul.f32 %v1314, %v1316
        %v1318 = vadd.f32 %v1314, %v1317
        %vm1319 = vweird.f32 %v1298
        %vm1320 = vweird.f32 %v1314
        %vm1321 = vmor %vm1319, %vm1320
        %v1322 = vsel %vm1321, %v1314, %v1318
        %v1323 = vand.u32 2147483647, %v1298
        %vm1324 = vcmp.eq.f32.partialorder %v1323, 8.507059e+37
        %v1325 = vand.u32 %v1298, 2147483648
        %v1326 = vor.u32 1.1754944e-38, %v1325
        %v1327 = vsel %vm1324, %v1326, %v1322
        %v1328 = vmul.f32 1.0, %v1327
        %v1329 = vmul.f32 %v1284, %v1313
        %v1330 = vmul.f32 %v1287, %v1328
        %v1331 = vld [vmem:[%s11] sm:$0xff]
        %v1332 = vld [vmem:[%s11 + $0x8] sm:$0xff]
        %v1333 = vld [vmem:[%s11 + $0x10] sm:$0xff]
        %v1334 = vld [vmem:[%s11 + $0x18] sm:$0xff]
        %v1335 = vld [vmem:[%s11 + $0x20] sm:$0xff]
        %v1336 = vld [vmem:[%s11 + $0x28] sm:$0xff]
        %v1337 = vld [vmem:[%s11 + $0x30] sm:$0xff]
        %v1338 = vld [vmem:[%s11 + $0x38] sm:$0xff]
        %v1339 = vld [vmem:[%s11 + $0x40] sm:$0xff]
        %v1340 = vld [vmem:[%s11 + $0x48] sm:$0xff]
        %v1341 = vld [vmem:[%s11 + $0x50] sm:$0xff]
        %v1342 = vld [vmem:[%s11 + $0x58] sm:$0xff]
        %v1343 = vld [vmem:[%s11 + $0x60] sm:$0xff]
        %v1344 = vld [vmem:[%s11 + $0x68] sm:$0xff]
        %v1345 = vld [vmem:[%s11 + $0x70] sm:$0xff]
        %v1346 = vld [vmem:[%s11 + $0x78] sm:$0xff]
        %v1347 = vld [vmem:[%s12] sm:$0x1]
        %v1349 = vperm.slane %v1347, 0
        %1351 = vmatpush.msra.mxu0 %v1346
        %1352 = vmatpush.msra.mxu0 %v1345
        %1353 = vmatpush.msra.mxu0 %v1344
        %1354 = vmatpush.msra.mxu0 %v1343
        %1355 = vmatpush.msra.mxu0 %v1342
        %1356 = vmatpush.msra.mxu0 %v1341
        %1357 = vmatpush.msra.mxu0 %v1340
        %1358 = vmatpush.msra.mxu0 %v1339
        %1359 = vmatpush.msra.mxu0 %v1338
        %1360 = vmatpush.msra.mxu0 %v1337
        %1361 = vmatpush.msra.mxu0 %v1336
        %1362 = vmatpush.msra.mxu0 %v1335
        %1363 = vmatpush.msra.mxu0 %v1334
        %1364 = vmatpush.msra.mxu0 %v1333
        %1365 = vmatpush.msra.mxu0 %v1332
        %1366 = vmatpush.msra.mxu0 %v1331
        %1367 = vmatmul.f32.gmra.mxu0 %v1329
        %v1368 = vpop.f32.mrf.mxu0
        %v1369 = vadd.f32 %v1349, %v1368
        %1370 = vmatmul.f32.gmra.mxu0 %v1330
        %v1371 = vpop.f32.mrf.mxu0
        %v1372 = vadd.f32 %v1349, %v1371
        %1373 = vdwg.mxu0
        %v1374 = vadd.f32 %v1194, %v1369
        %v1375 = vadd.f32 %v1195, %v1372
        %1376 = vst.msk [vmem:[%s434] sm:$0xff] %vm446, %v1374
        %1377 = vst.msk [vmem:[%s434 + $0x8] sm:$0xff] %vm446, %v1375
        %s1378 = sand.u32 %s313, 1
        %s1379 = scalar_lea.sflag [#allocation3], %s1378
        %s1380 = sand.u32 %s313, 1
        %s1381 = smul.addr %s1380, 16
        %s1382 = scalar_lea.vmem [#allocation2], %s1381
        // Predicated region
        $region73: #{tpu_custom_call.1} parent=71 // pred_check
          %p1383 = pneg %p323
        $region74: #{tpu_custom_call.1} parent=71 // pred_check_branch
          %1385 = sbr.rel (%p1383) target = $region76
        $region75: #{tpu_custom_call.1} parent=71 // pred_region
          %s1386 = smul.u32 2, %s27
          %1388 = vsyncadd %s1379, 0
          %s1389 = smul.addr %s1386, 8
          %s1390 = scalar_lea.hbm %s13, %s1389
          %s1391 = sshll.u32 %s1382, 4
          %s1392 = int_to_ptr.vmem [resolvable:$true] %s1391
          %s1393 = sshll.u32 %s1390, 4
          %s1394 = int_to_ptr.hbm [resolvable:$true] %s1393
          %1399 = dma.vmem_to_hbm [thread:$0]  %s1392, 256, %s1394, %s1379, 128, 128, 8
        $region76: #{tpu_custom_call.1} parent=71 // pred_fallthru
          _
      $region72: #{tpu_custom_call.1} parent=5 // pred_fallthru
        _
      %p1400 = scmp.le.s32.totalorder 2, %s22
      // Predicated region
      $region77: #{tpu_custom_call.1} parent=5 // pred_check
        %p1401 = pneg %p1400
      $region78: #{tpu_custom_call.1} parent=5 // pred_check_branch
        %1403 = sbr.rel (%p1401) target = $region80
      $region79: #{tpu_custom_call.1} parent=5 // pred_region
        %s1404 = ssub.s32 %s22, 2
        // Predicated region
        $region81: #{tpu_custom_call.1} parent=79 // pred_check
          %p1405 = pneg %p329
        $region82: #{tpu_custom_call.1} parent=79 // pred_check_branch
          %1407 = sbr.rel (%p1405) target = $region84
        $region83: #{tpu_custom_call.1} parent=79 // pred_region
          %s1408 = sand.u32 %s314, 1
          %s1409 = scalar_lea.sflag [#allocation3], %s1408
          %s1410 = sand.u32 %s314, 1
          %s1411 = smul.addr %s1410, 16
          %s1412 = scalar_lea.vmem [#allocation2], %s1411
          %1414 = dma.done %s1409, 256
        $region84: #{tpu_custom_call.1} parent=79 // pred_fallthru
          _
      $region80: #{tpu_custom_call.1} parent=5 // pred_fallthru
        _
    $region6: #{tpu_custom_call.1} parent=1 // loop_footer
      %s26 = sadd.s32 1, %s22
    $region7: #{tpu_custom_call.1} parent=1 // loop_footer_branch
      %21 = sbr.rel target = $region3
    $region8: #{tpu_custom_call.1} parent=1 // loop_exit
      _
    %1415 = vsyncpa [#allocation3], 1
    %s1416 = scalar_lea.sflag [#allocation3], 1
    %1417 = vsyncpa %s1416, 1

</llo_original>
